<compile_context>
chip_gen: v7x
topology: tpu7x:2x2x1
jax: 0.10.0
libtpu: 0.0.40
codegen_flags: <defaults>
</compile_context>

<pallas_src>
import jax
import jax.numpy as jnp
import numpy as np
from jax import lax
from jax.experimental import pallas as pl
from jax.experimental.pallas import tpu as pltpu


def bptru_kernel(x_ref, wu_ref, wch_ref, bias_ref,
                 out_ref, h_out_ref, c_out_ref,
                 xh_scr):
    # x_ref   : (L*B, I)   time-major flattened input
    # wu_ref  : (I, 4H)    W_u^T
    # wch_ref : (2H, H)    [W_c^T ; W_h^T]   (fused recurrent weight)
    # bias_ref: (5, H)     rows = b_f, v_f, b_r, v_r, b_o
    # out_ref : (L, B, H)  per-step hidden outputs
    # h_out_ref, c_out_ref : (B, H) final state
    # xh_scr  : (L*B, 4H)  staged input projections
    L, B, H = out_ref.shape

    # ---- non-recurrent work, hoisted off the serial chain -------------------
    # xh[t] = x[t] @ W_u^T for ALL timesteps in one MXU push.
    xh_scr[...] = jnp.dot(x_ref[...], wu_ref[...],
                          preferred_element_type=jnp.float32)

    # Load fused recurrent weight / biases once (not once per timestep).
    w_ch = wch_ref[...].astype(jnp.float32)            # (2H, H)
    bias = bias_ref[...].astype(jnp.float32)           # (5, H)
    b_f = jnp.broadcast_to(bias[0:1, :], (B, H))
    v_f = jnp.broadcast_to(bias[1:2, :], (B, H))
    b_r = jnp.broadcast_to(bias[2:3, :], (B, H))
    v_r = jnp.broadcast_to(bias[3:4, :], (B, H))
    b_o = jnp.broadcast_to(bias[4:5, :], (B, H))

    # ---- sequential recurrence ----------------------------------------------
    def step(t, carry):
        h, c = carry                                    # (B, H) f32 each
        xh = xh_scr[pl.ds(t * B, B), :]                 # (B, 4H)
        x1 = xh[:, 0 * H:1 * H]
        x2 = xh[:, 1 * H:2 * H]
        x3 = xh[:, 2 * H:3 * H]
        x4 = xh[:, 3 * H:4 * H]

        f = jax.nn.sigmoid(x1 + v_f * c + b_f)
        r = jax.nn.sigmoid(x2 + v_r * c + b_r)
        # c @ W_c^T + h @ W_h^T  ==  [c, h] @ [W_c^T ; W_h^T]  (one MXU op)
        ch = jnp.concatenate([c, h], axis=-1)           # (B, 2H)
        o = jax.nn.sigmoid(
            jnp.dot(ch, w_ch, preferred_element_type=jnp.float32) + b_o)

        new_c = jnp.tanh(f * c + (1.0 - f) * x3 + o * h)
        new_h = jnp.tanh(r * h + (1.0 - r) * x4 + o * c)

        # VMEM-resident output block; HBM writeback is one bulk DMA at the end.
        out_ref[t] = new_h.astype(out_ref.dtype)
        return new_h, new_c

    h0 = jnp.zeros((B, H), jnp.float32)                 # init_hidden: zeros
    c0 = jnp.zeros((B, H), jnp.float32)
    # Short, fixed trip-count -> unroll for LLO scheduling visibility.
    h_fin, c_fin = lax.fori_loop(0, L, step, (h0, c0), unroll=(L <= 16))

    # Final hidden state, written exactly once.
    h_out_ref[...] = h_fin.astype(h_out_ref.dtype)
    c_out_ref[...] = c_fin.astype(c_out_ref.dtype)


def bptru_forward(x, params, hidden_size):
    """x: (seq, batch, input_size) — PyTorch batch_first=False layout."""
    L, B, I = x.shape
    H = hidden_size

    # Weight prep (nn.Linear stores (out, in); kernel right-multiplies).
    wu_t = params["W_u"].T                                           # (I, 4H)
    wch_t = jnp.concatenate([params["W_c"].T, params["W_h"].T], 0)   # (2H, H)
    bias = jnp.stack([params["b_f"], params["v_f"],
                      params["b_r"], params["v_r"],
                      params["b_o"]], axis=0)                        # (5, H)
    x_flat = x.reshape(L * B, I)                                     # time-major

    out_seq, h_fin, c_fin = pl.pallas_call(
        bptru_kernel,
        out_shape=(jax.ShapeDtypeStruct((L, B, H), x.dtype),
                   jax.ShapeDtypeStruct((B, H), x.dtype),
                   jax.ShapeDtypeStruct((B, H), x.dtype)),
        grid_spec=pltpu.PrefetchScalarGridSpec(
            num_scalar_prefetch=0,
            grid=(1,),                     # single invocation; time loop in-kernel
            in_specs=[
                pl.BlockSpec((L * B, I), lambda i: (0, 0)),
                pl.BlockSpec((I, 4 * H), lambda i: (0, 0)),
                pl.BlockSpec((2 * H, H), lambda i: (0, 0)),
                pl.BlockSpec((5, H), lambda i: (0, 0)),
            ],
            out_specs=[
                pl.BlockSpec((L, B, H), lambda i: (0, 0, 0)),
                pl.BlockSpec((B, H), lambda i: (0, 0)),
                pl.BlockSpec((B, H), lambda i: (0, 0)),
            ],
            # TODO(synk): scratch/gate math is kept f32 even for bf16 inputs
            # (correct on all generations; v5e has no bf16 VPU/EUP anyway).
            scratch_shapes=[pltpu.VMEM((L * B, 4 * H), jnp.float32)]),
        compiler_params=pltpu.CompilerParams(
            dimension_semantics=("arbitrary",)),
    )(x_flat, wu_t, wch_t, bias)

    # Match PyTorch forward(): output (batch, seq, hidden); states (batch,1,hidden).
    output = jnp.transpose(out_seq, (1, 0, 2))
    return output, (h_fin[:, None, :], c_fin[:, None, :])


def bptru_ref(x, params, H):
    """Pure-JAX reference matching the PyTorch forward exactly."""
    L, B, I = x.shape
    h = jnp.zeros((B, H), x.dtype)
    c = jnp.zeros((B, H), x.dtype)
    outs = []
    for t in range(L):
        xh = x[t] @ params["W_u"].T
        x1, x2, x3, x4 = jnp.split(xh, 4, axis=-1)
        f = jax.nn.sigmoid(x1 + params["v_f"] * c + params["b_f"])
        r = jax.nn.sigmoid(x2 + params["v_r"] * c + params["b_r"])
        o = jax.nn.sigmoid(c @ params["W_c"].T + h @ params["W_h"].T
                           + params["b_o"])
        new_c = jnp.tanh(f * c + (1.0 - f) * x3 + o * h)
        new_h = jnp.tanh(r * h + (1.0 - r) * x4 + o * c)
        h, c = new_h, new_c
        outs.append(new_h)
    return jnp.stack(outs, axis=1), (h[:, None, :], c[:, None, :])


if __name__ == "__main__":
    INPUT = 8
    HIDDEN = 32
    BATCH = 2
    SEQ = 8

    key = jax.random.PRNGKey(0)
    k = jax.random.split(key, 9)
    params = {
        # nn.Linear weight shapes: (out_features, in_features)
        "W_u": jax.random.normal(k[0], (4 * HIDDEN, INPUT), jnp.float32) * 0.1,
        "W_c": jax.random.normal(k[1], (HIDDEN, HIDDEN), jnp.float32) * 0.1,
        "W_h": jax.random.normal(k[2], (HIDDEN, HIDDEN), jnp.float32) * 0.1,
        "b_f": jax.random.normal(k[3], (HIDDEN,), jnp.float32),
        "v_f": jax.random.normal(k[4], (HIDDEN,), jnp.float32),
        "b_r": jax.random.normal(k[5], (HIDDEN,), jnp.float32),
        "v_r": jax.random.normal(k[6], (HIDDEN,), jnp.float32),
        "b_o": jax.random.normal(k[7], (HIDDEN,), jnp.float32),
    }

    # x in (seq, batch, input) — PyTorch batch_first=False layout
    x = jax.random.normal(k[8], (SEQ, BATCH, INPUT), jnp.float32)

    out, (h_fin, c_fin) = bptru_forward(x, params, HIDDEN)
    jax.block_until_ready((out, h_fin, c_fin))

    out_ref, (h_ref, c_ref) = bptru_ref(x, params, HIDDEN)
    np.testing.assert_allclose(np.asarray(out), np.asarray(out_ref),
                               rtol=1e-4, atol=1e-4)
    np.testing.assert_allclose(np.asarray(h_fin), np.asarray(h_ref),
                               rtol=1e-4, atol=1e-4)
    np.testing.assert_allclose(np.asarray(c_fin), np.asarray(c_ref),
                               rtol=1e-4, atol=1e-4)

    print("KERNEL_OK")
</pallas_src>

<mosaic_0001>
module attributes {stable_mosaic.version = 11 : i64} {
  func.func @bptru_kernel(%arg0: i32, %arg1: memref<16x8xf32, #tpu.memory_space<vmem>>, %arg2: memref<8x128xf32, #tpu.memory_space<vmem>>, %arg3: memref<64x32xf32, #tpu.memory_space<vmem>>, %arg4: memref<5x32xf32, #tpu.memory_space<vmem>>, %arg5: memref<8x2x32xf32, #tpu.memory_space<vmem>>, %arg6: memref<2x32xf32, #tpu.memory_space<vmem>>, %arg7: memref<2x32xf32, #tpu.memory_space<vmem>>, %arg8: memref<16x128xf32, #tpu.memory_space<vmem>>) attributes {dimension_semantics = [#tpu.dimension_semantics<arbitrary>], iteration_bounds = array<i64: 1>, scalar_prefetch = 0 : i64, scratch_operands = 1 : i64, tpu.core_type = #tpu.core_type<tc>, window_params = [{pipeline_mode = #tpu.pipeline_mode<synchronous>, transform_indices = @transform_0, window_bounds = array<i64: 16, 8>}, {pipeline_mode = #tpu.pipeline_mode<synchronous>, transform_indices = @transform_1, window_bounds = array<i64: 8, 128>}, {pipeline_mode = #tpu.pipeline_mode<synchronous>, transform_indices = @transform_2, window_bounds = array<i64: 64, 32>}, {pipeline_mode = #tpu.pipeline_mode<synchronous>, transform_indices = @transform_3, window_bounds = array<i64: 5, 32>}, {pipeline_mode = #tpu.pipeline_mode<synchronous>, transform_indices = @transform_4, window_bounds = array<i64: 8, 2, 32>}, {pipeline_mode = #tpu.pipeline_mode<synchronous>, transform_indices = @transform_5, window_bounds = array<i64: 2, 32>}, {pipeline_mode = #tpu.pipeline_mode<synchronous>, transform_indices = @transform_6, window_bounds = array<i64: 2, 32>}]} {
    %c0 = arith.constant 0 : index
    %c0_0 = arith.constant 0 : index
    %0 = vector.load %arg1[%c0, %c0_0] : memref<16x8xf32, #tpu.memory_space<vmem>>, vector<16x8xf32>
    %c0_1 = arith.constant 0 : index
    %c0_2 = arith.constant 0 : index
    %1 = vector.load %arg2[%c0_1, %c0_2] : memref<8x128xf32, #tpu.memory_space<vmem>>, vector<8x128xf32>
    %cst = arith.constant dense<0.000000e+00> : vector<16x128xf32>
    %2 = tpu.matmul %0, %1, %cst {dimension_numbers = #tpu.dot_dimension_numbers<[1], [0], [0], [1], [0, 0, 1, 1], [], []>} : vector<16x8xf32>, vector<8x128xf32>, vector<16x128xf32> -> vector<16x128xf32>
    %c0_3 = arith.constant 0 : index
    %c0_4 = arith.constant 0 : index
    %3 = vector.load %arg8[%c0_3, %c0_4] : memref<16x128xf32, #tpu.memory_space<vmem>>, vector<16x128xf32>
    tpu.vector_store %arg8[%c0_3, %c0_4], %2 {strides = array<i32>} : memref<16x128xf32, #tpu.memory_space<vmem>>, vector<16x128xf32>,
    %c0_5 = arith.constant 0 : index
    %c0_6 = arith.constant 0 : index
    %4 = vector.load %arg3[%c0_5, %c0_6] : memref<64x32xf32, #tpu.memory_space<vmem>>, vector<64x32xf32>
    %c0_7 = arith.constant 0 : index
    %c0_8 = arith.constant 0 : index
    %5 = vector.load %arg4[%c0_7, %c0_8] : memref<5x32xf32, #tpu.memory_space<vmem>>, vector<5x32xf32>
    %6 = vector.extract_strided_slice %5 {offsets = [0, 0], sizes = [1, 32], strides = [1, 1]} : vector<5x32xf32> to vector<1x32xf32>
    %7 = vector.shape_cast %6 : vector<1x32xf32> to vector<1x32xf32>
    %8 = vector.broadcast %7 : vector<1x32xf32> to vector<2x32xf32>
    %9 = vector.extract_strided_slice %5 {offsets = [1, 0], sizes = [1, 32], strides = [1, 1]} : vector<5x32xf32> to vector<1x32xf32>
    %10 = vector.shape_cast %9 : vector<1x32xf32> to vector<1x32xf32>
    %11 = vector.broadcast %10 : vector<1x32xf32> to vector<2x32xf32>
    %12 = vector.extract_strided_slice %5 {offsets = [2, 0], sizes = [1, 32], strides = [1, 1]} : vector<5x32xf32> to vector<1x32xf32>
    %13 = vector.shape_cast %12 : vector<1x32xf32> to vector<1x32xf32>
    %14 = vector.broadcast %13 : vector<1x32xf32> to vector<2x32xf32>
    %15 = vector.extract_strided_slice %5 {offsets = [3, 0], sizes = [1, 32], strides = [1, 1]} : vector<5x32xf32> to vector<1x32xf32>
    %16 = vector.shape_cast %15 : vector<1x32xf32> to vector<1x32xf32>
    %17 = vector.broadcast %16 : vector<1x32xf32> to vector<2x32xf32>
    %18 = vector.extract_strided_slice %5 {offsets = [4, 0], sizes = [1, 32], strides = [1, 1]} : vector<5x32xf32> to vector<1x32xf32>
    %19 = vector.shape_cast %18 : vector<1x32xf32> to vector<1x32xf32>
    %20 = vector.broadcast %19 : vector<1x32xf32> to vector<2x32xf32>
    %cst_9 = arith.constant 0.000000e+00 : f32
    %21 = vector.broadcast %cst_9 : f32 to vector<2x32xf32>
    %cst_10 = arith.constant 0.000000e+00 : f32
    %22 = vector.broadcast %cst_10 : f32 to vector<2x32xf32>
    %c0_i32 = arith.constant 0 : i32
    %c2_i32 = arith.constant 2 : i32
    %23 = arith.muli %c0_i32, %c2_i32 : i32
    %24 = arith.index_cast %23 : i32 to index
    %c0_11 = arith.constant 0 : index
    %25 = vector.load %arg8[%24, %c0_11] : memref<16x128xf32, #tpu.memory_space<vmem>>, vector<2x128xf32>
    %26 = vector.extract_strided_slice %25 {offsets = [0, 0], sizes = [2, 32], strides = [1, 1]} : vector<2x128xf32> to vector<2x32xf32>
    %27 = vector.extract_strided_slice %25 {offsets = [0, 32], sizes = [2, 32], strides = [1, 1]} : vector<2x128xf32> to vector<2x32xf32>
    %28 = vector.extract_strided_slice %25 {offsets = [0, 64], sizes = [2, 32], strides = [1, 1]} : vector<2x128xf32> to vector<2x32xf32>
    %29 = vector.extract_strided_slice %25 {offsets = [0, 96], sizes = [2, 32], strides = [1, 1]} : vector<2x128xf32> to vector<2x32xf32>
    %30 = arith.mulf %11, %22 : vector<2x32xf32>
    %31 = arith.addf %26, %30 : vector<2x32xf32>
    %32 = arith.addf %31, %8 : vector<2x32xf32>
    %33 = arith.negf %32 : vector<2x32xf32>
    %34 = math.exp %33 : vector<2x32xf32>
    %cst_12 = arith.constant 1.000000e+00 : f32
    %35 = vector.broadcast %cst_12 : f32 to vector<2x32xf32>
    %36 = arith.addf %35, %34 : vector<2x32xf32>
    %37 = arith.divf %35, %36 : vector<2x32xf32>
    %38 = arith.mulf %17, %22 : vector<2x32xf32>
    %39 = arith.addf %27, %38 : vector<2x32xf32>
    %40 = arith.addf %39, %14 : vector<2x32xf32>
    %41 = arith.negf %40 : vector<2x32xf32>
    %42 = math.exp %41 : vector<2x32xf32>
    %cst_13 = arith.constant 1.000000e+00 : f32
    %43 = vector.broadcast %cst_13 : f32 to vector<2x32xf32>
    %44 = arith.addf %43, %42 : vector<2x32xf32>
    %45 = arith.divf %43, %44 : vector<2x32xf32>
    %46 = tpu.concatenate %22, %21 in 1 : vector<2x32xf32>, vector<2x32xf32> -> vector<2x64xf32>
    %cst_14 = arith.constant dense<0.000000e+00> : vector<2x32xf32>
    %47 = tpu.matmul %46, %4, %cst_14 {dimension_numbers = #tpu.dot_dimension_numbers<[1], [0], [0], [1], [0, 0, 1, 1], [], []>} : vector<2x64xf32>, vector<64x32xf32>, vector<2x32xf32> -> vector<2x32xf32>
    %48 = arith.addf %47, %20 : vector<2x32xf32>
    %49 = arith.negf %48 : vector<2x32xf32>
    %50 = math.exp %49 : vector<2x32xf32>
    %cst_15 = arith.constant 1.000000e+00 : f32
    %51 = vector.broadcast %cst_15 : f32 to vector<2x32xf32>
    %52 = arith.addf %51, %50 : vector<2x32xf32>
    %53 = arith.divf %51, %52 : vector<2x32xf32>
    %54 = arith.mulf %37, %22 : vector<2x32xf32>
    %cst_16 = arith.constant 1.000000e+00 : f32
    %55 = vector.broadcast %cst_16 : f32 to vector<2x32xf32>
    %56 = arith.subf %55, %37 : vector<2x32xf32>
    %57 = arith.mulf %56, %28 : vector<2x32xf32>
    %58 = arith.addf %54, %57 : vector<2x32xf32>
    %59 = arith.mulf %53, %21 : vector<2x32xf32>
    %60 = arith.addf %58, %59 : vector<2x32xf32>
    %61 = math.tanh %60 : vector<2x32xf32>
    %62 = arith.mulf %45, %21 : vector<2x32xf32>
    %cst_17 = arith.constant 1.000000e+00 : f32
    %63 = vector.broadcast %cst_17 : f32 to vector<2x32xf32>
    %64 = arith.subf %63, %45 : vector<2x32xf32>
    %65 = arith.mulf %64, %29 : vector<2x32xf32>
    %66 = arith.addf %62, %65 : vector<2x32xf32>
    %67 = arith.mulf %53, %22 : vector<2x32xf32>
    %68 = arith.addf %66, %67 : vector<2x32xf32>
    %69 = math.tanh %68 : vector<2x32xf32>
    %70 = arith.index_cast %c0_i32 : i32 to index
    %c0_18 = arith.constant 0 : index
    %c0_19 = arith.constant 0 : index
    %71 = vector.load %arg5[%70, %c0_18, %c0_19] : memref<8x2x32xf32, #tpu.memory_space<vmem>>, vector<1x2x32xf32>
    %72 = vector.shape_cast %71 : vector<1x2x32xf32> to vector<2x32xf32>
    %73 = vector.shape_cast %69 : vector<2x32xf32> to vector<1x2x32xf32>
    tpu.vector_store %arg5[%70, %c0_18, %c0_19], %73 {strides = array<i32>} : memref<8x2x32xf32, #tpu.memory_space<vmem>>, vector<1x2x32xf32>,
    %c1_i32 = arith.constant 1 : i32
    %c2_i32_20 = arith.constant 2 : i32
    %74 = arith.muli %c1_i32, %c2_i32_20 : i32
    %75 = arith.index_cast %74 : i32 to index
    %c0_21 = arith.constant 0 : index
    %76 = vector.load %arg8[%75, %c0_21] : memref<16x128xf32, #tpu.memory_space<vmem>>, vector<2x128xf32>
    %77 = vector.extract_strided_slice %76 {offsets = [0, 0], sizes = [2, 32], strides = [1, 1]} : vector<2x128xf32> to vector<2x32xf32>
    %78 = vector.extract_strided_slice %76 {offsets = [0, 32], sizes = [2, 32], strides = [1, 1]} : vector<2x128xf32> to vector<2x32xf32>
    %79 = vector.extract_strided_slice %76 {offsets = [0, 64], sizes = [2, 32], strides = [1, 1]} : vector<2x128xf32> to vector<2x32xf32>
    %80 = vector.extract_strided_slice %76 {offsets = [0, 96], sizes = [2, 32], strides = [1, 1]} : vector<2x128xf32> to vector<2x32xf32>
    %81 = arith.mulf %11, %61 : vector<2x32xf32>
    %82 = arith.addf %77, %81 : vector<2x32xf32>
    %83 = arith.addf %82, %8 : vector<2x32xf32>
    %84 = arith.negf %83 : vector<2x32xf32>
    %85 = math.exp %84 : vector<2x32xf32>
    %cst_22 = arith.constant 1.000000e+00 : f32
    %86 = vector.broadcast %cst_22 : f32 to vector<2x32xf32>
    %87 = arith.addf %86, %85 : vector<2x32xf32>
    %88 = arith.divf %86, %87 : vector<2x32xf32>
    %89 = arith.mulf %17, %61 : vector<2x32xf32>
    %90 = arith.addf %78, %89 : vector<2x32xf32>
    %91 = arith.addf %90, %14 : vector<2x32xf32>
    %92 = arith.negf %91 : vector<2x32xf32>
    %93 = math.exp %92 : vector<2x32xf32>
    %cst_23 = arith.constant 1.000000e+00 : f32
    %94 = vector.broadcast %cst_23 : f32 to vector<2x32xf32>
    %95 = arith.addf %94, %93 : vector<2x32xf32>
    %96 = arith.divf %94, %95 : vector<2x32xf32>
    %97 = tpu.concatenate %61, %69 in 1 : vector<2x32xf32>, vector<2x32xf32> -> vector<2x64xf32>
    %cst_24 = arith.constant dense<0.000000e+00> : vector<2x32xf32>
    %98 = tpu.matmul %97, %4, %cst_24 {dimension_numbers = #tpu.dot_dimension_numbers<[1], [0], [0], [1], [0, 0, 1, 1], [], []>} : vector<2x64xf32>, vector<64x32xf32>, vector<2x32xf32> -> vector<2x32xf32>
    %99 = arith.addf %98, %20 : vector<2x32xf32>
    %100 = arith.negf %99 : vector<2x32xf32>
    %101 = math.exp %100 : vector<2x32xf32>
    %cst_25 = arith.constant 1.000000e+00 : f32
    %102 = vector.broadcast %cst_25 : f32 to vector<2x32xf32>
    %103 = arith.addf %102, %101 : vector<2x32xf32>
    %104 = arith.divf %102, %103 : vector<2x32xf32>
    %105 = arith.mulf %88, %61 : vector<2x32xf32>
    %cst_26 = arith.constant 1.000000e+00 : f32
    %106 = vector.broadcast %cst_26 : f32 to vector<2x32xf32>
    %107 = arith.subf %106, %88 : vector<2x32xf32>
    %108 = arith.mulf %107, %79 : vector<2x32xf32>
    %109 = arith.addf %105, %108 : vector<2x32xf32>
    %110 = arith.mulf %104, %69 : vector<2x32xf32>
    %111 = arith.addf %109, %110 : vector<2x32xf32>
    %112 = math.tanh %111 : vector<2x32xf32>
    %113 = arith.mulf %96, %69 : vector<2x32xf32>
    %cst_27 = arith.constant 1.000000e+00 : f32
    %114 = vector.broadcast %cst_27 : f32 to vector<2x32xf32>
    %115 = arith.subf %114, %96 : vector<2x32xf32>
    %116 = arith.mulf %115, %80 : vector<2x32xf32>
    %117 = arith.addf %113, %116 : vector<2x32xf32>
    %118 = arith.mulf %104, %61 : vector<2x32xf32>
    %119 = arith.addf %117, %118 : vector<2x32xf32>
    %120 = math.tanh %119 : vector<2x32xf32>
    %121 = arith.index_cast %c1_i32 : i32 to index
    %c0_28 = arith.constant 0 : index
    %c0_29 = arith.constant 0 : index
    %122 = vector.load %arg5[%121, %c0_28, %c0_29] : memref<8x2x32xf32, #tpu.memory_space<vmem>>, vector<1x2x32xf32>
    %123 = vector.shape_cast %122 : vector<1x2x32xf32> to vector<2x32xf32>
    %124 = vector.shape_cast %120 : vector<2x32xf32> to vector<1x2x32xf32>
    tpu.vector_store %arg5[%121, %c0_28, %c0_29], %124 {strides = array<i32>} : memref<8x2x32xf32, #tpu.memory_space<vmem>>, vector<1x2x32xf32>,
    %c2_i32_30 = arith.constant 2 : i32
    %c2_i32_31 = arith.constant 2 : i32
    %125 = arith.muli %c2_i32_30, %c2_i32_31 : i32
    %126 = arith.index_cast %125 : i32 to index
    %c0_32 = arith.constant 0 : index
    %127 = vector.load %arg8[%126, %c0_32] : memref<16x128xf32, #tpu.memory_space<vmem>>, vector<2x128xf32>
    %128 = vector.extract_strided_slice %127 {offsets = [0, 0], sizes = [2, 32], strides = [1, 1]} : vector<2x128xf32> to vector<2x32xf32>
    %129 = vector.extract_strided_slice %127 {offsets = [0, 32], sizes = [2, 32], strides = [1, 1]} : vector<2x128xf32> to vector<2x32xf32>
    %130 = vector.extract_strided_slice %127 {offsets = [0, 64], sizes = [2, 32], strides = [1, 1]} : vector<2x128xf32> to vector<2x32xf32>
    %131 = vector.extract_strided_slice %127 {offsets = [0, 96], sizes = [2, 32], strides = [1, 1]} : vector<2x128xf32> to vector<2x32xf32>
    %132 = arith.mulf %11, %112 : vector<2x32xf32>
    %133 = arith.addf %128, %132 : vector<2x32xf32>
    %134 = arith.addf %133, %8 : vector<2x32xf32>
    %135 = arith.negf %134 : vector<2x32xf32>
    %136 = math.exp %135 : vector<2x32xf32>
    %cst_33 = arith.constant 1.000000e+00 : f32
    %137 = vector.broadcast %cst_33 : f32 to vector<2x32xf32>
    %138 = arith.addf %137, %136 : vector<2x32xf32>
    %139 = arith.divf %137, %138 : vector<2x32xf32>
    %140 = arith.mulf %17, %112 : vector<2x32xf32>
    %141 = arith.addf %129, %140 : vector<2x32xf32>
    %142 = arith.addf %141, %14 : vector<2x32xf32>
    %143 = arith.negf %142 : vector<2x32xf32>
    %144 = math.exp %143 : vector<2x32xf32>
    %cst_34 = arith.constant 1.000000e+00 : f32
    %145 = vector.broadcast %cst_34 : f32 to vector<2x32xf32>
    %146 = arith.addf %145, %144 : vector<2x32xf32>
    %147 = arith.divf %145, %146 : vector<2x32xf32>
    %148 = tpu.concatenate %112, %120 in 1 : vector<2x32xf32>, vector<2x32xf32> -> vector<2x64xf32>
    %cst_35 = arith.constant dense<0.000000e+00> : vector<2x32xf32>
    %149 = tpu.matmul %148, %4, %cst_35 {dimension_numbers = #tpu.dot_dimension_numbers<[1], [0], [0], [1], [0, 0, 1, 1], [], []>} : vector<2x64xf32>, vector<64x32xf32>, vector<2x32xf32> -> vector<2x32xf32>
    %150 = arith.addf %149, %20 : vector<2x32xf32>
    %151 = arith.negf %150 : vector<2x32xf32>
    %152 = math.exp %151 : vector<2x32xf32>
    %cst_36 = arith.constant 1.000000e+00 : f32
    %153 = vector.broadcast %cst_36 : f32 to vector<2x32xf32>
    %154 = arith.addf %153, %152 : vector<2x32xf32>
    %155 = arith.divf %153, %154 : vector<2x32xf32>
    %156 = arith.mulf %139, %112 : vector<2x32xf32>
    %cst_37 = arith.constant 1.000000e+00 : f32
    %157 = vector.broadcast %cst_37 : f32 to vector<2x32xf32>
    %158 = arith.subf %157, %139 : vector<2x32xf32>
    %159 = arith.mulf %158, %130 : vector<2x32xf32>
    %160 = arith.addf %156, %159 : vector<2x32xf32>
    %161 = arith.mulf %155, %120 : vector<2x32xf32>
    %162 = arith.addf %160, %161 : vector<2x32xf32>
    %163 = math.tanh %162 : vector<2x32xf32>
    %164 = arith.mulf %147, %120 : vector<2x32xf32>
    %cst_38 = arith.constant 1.000000e+00 : f32
    %165 = vector.broadcast %cst_38 : f32 to vector<2x32xf32>
    %166 = arith.subf %165, %147 : vector<2x32xf32>
    %167 = arith.mulf %166, %131 : vector<2x32xf32>
    %168 = arith.addf %164, %167 : vector<2x32xf32>
    %169 = arith.mulf %155, %112 : vector<2x32xf32>
    %170 = arith.addf %168, %169 : vector<2x32xf32>
    %171 = math.tanh %170 : vector<2x32xf32>
    %172 = arith.index_cast %c2_i32_30 : i32 to index
    %c0_39 = arith.constant 0 : index
    %c0_40 = arith.constant 0 : index
    %173 = vector.load %arg5[%172, %c0_39, %c0_40] : memref<8x2x32xf32, #tpu.memory_space<vmem>>, vector<1x2x32xf32>
    %174 = vector.shape_cast %173 : vector<1x2x32xf32> to vector<2x32xf32>
    %175 = vector.shape_cast %171 : vector<2x32xf32> to vector<1x2x32xf32>
    tpu.vector_store %arg5[%172, %c0_39, %c0_40], %175 {strides = array<i32>} : memref<8x2x32xf32, #tpu.memory_space<vmem>>, vector<1x2x32xf32>,
    %c3_i32 = arith.constant 3 : i32
    %c2_i32_41 = arith.constant 2 : i32
    %176 = arith.muli %c3_i32, %c2_i32_41 : i32
    %177 = arith.index_cast %176 : i32 to index
    %c0_42 = arith.constant 0 : index
    %178 = vector.load %arg8[%177, %c0_42] : memref<16x128xf32, #tpu.memory_space<vmem>>, vector<2x128xf32>
    %179 = vector.extract_strided_slice %178 {offsets = [0, 0], sizes = [2, 32], strides = [1, 1]} : vector<2x128xf32> to vector<2x32xf32>
    %180 = vector.extract_strided_slice %178 {offsets = [0, 32], sizes = [2, 32], strides = [1, 1]} : vector<2x128xf32> to vector<2x32xf32>
    %181 = vector.extract_strided_slice %178 {offsets = [0, 64], sizes = [2, 32], strides = [1, 1]} : vector<2x128xf32> to vector<2x32xf32>
    %182 = vector.extract_strided_slice %178 {offsets = [0, 96], sizes = [2, 32], strides = [1, 1]} : vector<2x128xf32> to vector<2x32xf32>
    %183 = arith.mulf %11, %163 : vector<2x32xf32>
    %184 = arith.addf %179, %183 : vector<2x32xf32>
    %185 = arith.addf %184, %8 : vector<2x32xf32>
    %186 = arith.negf %185 : vector<2x32xf32>
    %187 = math.exp %186 : vector<2x32xf32>
    %cst_43 = arith.constant 1.000000e+00 : f32
    %188 = vector.broadcast %cst_43 : f32 to vector<2x32xf32>
    %189 = arith.addf %188, %187 : vector<2x32xf32>
    %190 = arith.divf %188, %189 : vector<2x32xf32>
    %191 = arith.mulf %17, %163 : vector<2x32xf32>
    %192 = arith.addf %180, %191 : vector<2x32xf32>
    %193 = arith.addf %192, %14 : vector<2x32xf32>
    %194 = arith.negf %193 : vector<2x32xf32>
    %195 = math.exp %194 : vector<2x32xf32>
    %cst_44 = arith.constant 1.000000e+00 : f32
    %196 = vector.broadcast %cst_44 : f32 to vector<2x32xf32>
    %197 = arith.addf %196, %195 : vector<2x32xf32>
    %198 = arith.divf %196, %197 : vector<2x32xf32>
    %199 = tpu.concatenate %163, %171 in 1 : vector<2x32xf32>, vector<2x32xf32> -> vector<2x64xf32>
    %cst_45 = arith.constant dense<0.000000e+00> : vector<2x32xf32>
    %200 = tpu.matmul %199, %4, %cst_45 {dimension_numbers = #tpu.dot_dimension_numbers<[1], [0], [0], [1], [0, 0, 1, 1], [], []>} : vector<2x64xf32>, vector<64x32xf32>, vector<2x32xf32> -> vector<2x32xf32>
    %201 = arith.addf %200, %20 : vector<2x32xf32>
    %202 = arith.negf %201 : vector<2x32xf32>
    %203 = math.exp %202 : vector<2x32xf32>
    %cst_46 = arith.constant 1.000000e+00 : f32
    %204 = vector.broadcast %cst_46 : f32 to vector<2x32xf32>
    %205 = arith.addf %204, %203 : vector<2x32xf32>
    %206 = arith.divf %204, %205 : vector<2x32xf32>
    %207 = arith.mulf %190, %163 : vector<2x32xf32>
    %cst_47 = arith.constant 1.000000e+00 : f32
    %208 = vector.broadcast %cst_47 : f32 to vector<2x32xf32>
    %209 = arith.subf %208, %190 : vector<2x32xf32>
    %210 = arith.mulf %209, %181 : vector<2x32xf32>
    %211 = arith.addf %207, %210 : vector<2x32xf32>
    %212 = arith.mulf %206, %171 : vector<2x32xf32>
    %213 = arith.addf %211, %212 : vector<2x32xf32>
    %214 = math.tanh %213 : vector<2x32xf32>
    %215 = arith.mulf %198, %171 : vector<2x32xf32>
    %cst_48 = arith.constant 1.000000e+00 : f32
    %216 = vector.broadcast %cst_48 : f32 to vector<2x32xf32>
    %217 = arith.subf %216, %198 : vector<2x32xf32>
    %218 = arith.mulf %217, %182 : vector<2x32xf32>
    %219 = arith.addf %215, %218 : vector<2x32xf32>
    %220 = arith.mulf %206, %163 : vector<2x32xf32>
    %221 = arith.addf %219, %220 : vector<2x32xf32>
    %222 = math.tanh %221 : vector<2x32xf32>
    %223 = arith.index_cast %c3_i32 : i32 to index
    %c0_49 = arith.constant 0 : index
    %c0_50 = arith.constant 0 : index
    %224 = vector.load %arg5[%223, %c0_49, %c0_50] : memref<8x2x32xf32, #tpu.memory_space<vmem>>, vector<1x2x32xf32>
    %225 = vector.shape_cast %224 : vector<1x2x32xf32> to vector<2x32xf32>
    %226 = vector.shape_cast %222 : vector<2x32xf32> to vector<1x2x32xf32>
    tpu.vector_store %arg5[%223, %c0_49, %c0_50], %226 {strides = array<i32>} : memref<8x2x32xf32, #tpu.memory_space<vmem>>, vector<1x2x32xf32>,
    %c4_i32 = arith.constant 4 : i32
    %c2_i32_51 = arith.constant 2 : i32
    %227 = arith.muli %c4_i32, %c2_i32_51 : i32
    %228 = arith.index_cast %227 : i32 to index
    %c0_52 = arith.constant 0 : index
    %229 = vector.load %arg8[%228, %c0_52] : memref<16x128xf32, #tpu.memory_space<vmem>>, vector<2x128xf32>
    %230 = vector.extract_strided_slice %229 {offsets = [0, 0], sizes = [2, 32], strides = [1, 1]} : vector<2x128xf32> to vector<2x32xf32>
    %231 = vector.extract_strided_slice %229 {offsets = [0, 32], sizes = [2, 32], strides = [1, 1]} : vector<2x128xf32> to vector<2x32xf32>
    %232 = vector.extract_strided_slice %229 {offsets = [0, 64], sizes = [2, 32], strides = [1, 1]} : vector<2x128xf32> to vector<2x32xf32>
    %233 = vector.extract_strided_slice %229 {offsets = [0, 96], sizes = [2, 32], strides = [1, 1]} : vector<2x128xf32> to vector<2x32xf32>
    %234 = arith.mulf %11, %214 : vector<2x32xf32>
    %235 = arith.addf %230, %234 : vector<2x32xf32>
    %236 = arith.addf %235, %8 : vector<2x32xf32>
    %237 = arith.negf %236 : vector<2x32xf32>
    %238 = math.exp %237 : vector<2x32xf32>
    %cst_53 = arith.constant 1.000000e+00 : f32
    %239 = vector.broadcast %cst_53 : f32 to vector<2x32xf32>
    %240 = arith.addf %239, %238 : vector<2x32xf32>
    %241 = arith.divf %239, %240 : vector<2x32xf32>
    %242 = arith.mulf %17, %214 : vector<2x32xf32>
    %243 = arith.addf %231, %242 : vector<2x32xf32>
    %244 = arith.addf %243, %14 : vector<2x32xf32>
    %245 = arith.negf %244 : vector<2x32xf32>
    %246 = math.exp %245 : vector<2x32xf32>
    %cst_54 = arith.constant 1.000000e+00 : f32
    %247 = vector.broadcast %cst_54 : f32 to vector<2x32xf32>
    %248 = arith.addf %247, %246 : vector<2x32xf32>
    %249 = arith.divf %247, %248 : vector<2x32xf32>
    %250 = tpu.concatenate %214, %222 in 1 : vector<2x32xf32>, vector<2x32xf32> -> vector<2x64xf32>
    %cst_55 = arith.constant dense<0.000000e+00> : vector<2x32xf32>
    %251 = tpu.matmul %250, %4, %cst_55 {dimension_numbers = #tpu.dot_dimension_numbers<[1], [0], [0], [1], [0, 0, 1, 1], [], []>} : vector<2x64xf32>, vector<64x32xf32>, vector<2x32xf32> -> vector<2x32xf32>
    %252 = arith.addf %251, %20 : vector<2x32xf32>
    %253 = arith.negf %252 : vector<2x32xf32>
    %254 = math.exp %253 : vector<2x32xf32>
    %cst_56 = arith.constant 1.000000e+00 : f32
    %255 = vector.broadcast %cst_56 : f32 to vector<2x32xf32>
    %256 = arith.addf %255, %254 : vector<2x32xf32>
    %257 = arith.divf %255, %256 : vector<2x32xf32>
    %258 = arith.mulf %241, %214 : vector<2x32xf32>
    %cst_57 = arith.constant 1.000000e+00 : f32
    %259 = vector.broadcast %cst_57 : f32 to vector<2x32xf32>
    %260 = arith.subf %259, %241 : vector<2x32xf32>
    %261 = arith.mulf %260, %232 : vector<2x32xf32>
    %262 = arith.addf %258, %261 : vector<2x32xf32>
    %263 = arith.mulf %257, %222 : vector<2x32xf32>
    %264 = arith.addf %262, %263 : vector<2x32xf32>
    %265 = math.tanh %264 : vector<2x32xf32>
    %266 = arith.mulf %249, %222 : vector<2x32xf32>
    %cst_58 = arith.constant 1.000000e+00 : f32
    %267 = vector.broadcast %cst_58 : f32 to vector<2x32xf32>
    %268 = arith.subf %267, %249 : vector<2x32xf32>
    %269 = arith.mulf %268, %233 : vector<2x32xf32>
    %270 = arith.addf %266, %269 : vector<2x32xf32>
    %271 = arith.mulf %257, %214 : vector<2x32xf32>
    %272 = arith.addf %270, %271 : vector<2x32xf32>
    %273 = math.tanh %272 : vector<2x32xf32>
    %274 = arith.index_cast %c4_i32 : i32 to index
    %c0_59 = arith.constant 0 : index
    %c0_60 = arith.constant 0 : index
    %275 = vector.load %arg5[%274, %c0_59, %c0_60] : memref<8x2x32xf32, #tpu.memory_space<vmem>>, vector<1x2x32xf32>
    %276 = vector.shape_cast %275 : vector<1x2x32xf32> to vector<2x32xf32>
    %277 = vector.shape_cast %273 : vector<2x32xf32> to vector<1x2x32xf32>
    tpu.vector_store %arg5[%274, %c0_59, %c0_60], %277 {strides = array<i32>} : memref<8x2x32xf32, #tpu.memory_space<vmem>>, vector<1x2x32xf32>,
    %c5_i32 = arith.constant 5 : i32
    %c2_i32_61 = arith.constant 2 : i32
    %278 = arith.muli %c5_i32, %c2_i32_61 : i32
    %279 = arith.index_cast %278 : i32 to index
    %c0_62 = arith.constant 0 : index
    %280 = vector.load %arg8[%279, %c0_62] : memref<16x128xf32, #tpu.memory_space<vmem>>, vector<2x128xf32>
    %281 = vector.extract_strided_slice %280 {offsets = [0, 0], sizes = [2, 32], strides = [1, 1]} : vector<2x128xf32> to vector<2x32xf32>
    %282 = vector.extract_strided_slice %280 {offsets = [0, 32], sizes = [2, 32], strides = [1, 1]} : vector<2x128xf32> to vector<2x32xf32>
    %283 = vector.extract_strided_slice %280 {offsets = [0, 64], sizes = [2, 32], strides = [1, 1]} : vector<2x128xf32> to vector<2x32xf32>
    %284 = vector.extract_strided_slice %280 {offsets = [0, 96], sizes = [2, 32], strides = [1, 1]} : vector<2x128xf32> to vector<2x32xf32>
    %285 = arith.mulf %11, %265 : vector<2x32xf32>
    %286 = arith.addf %281, %285 : vector<2x32xf32>
    %287 = arith.addf %286, %8 : vector<2x32xf32>
    %288 = arith.negf %287 : vector<2x32xf32>
    %289 = math.exp %288 : vector<2x32xf32>
    %cst_63 = arith.constant 1.000000e+00 : f32
    %290 = vector.broadcast %cst_63 : f32 to vector<2x32xf32>
    %291 = arith.addf %290, %289 : vector<2x32xf32>
    %292 = arith.divf %290, %291 : vector<2x32xf32>
    %293 = arith.mulf %17, %265 : vector<2x32xf32>
    %294 = arith.addf %282, %293 : vector<2x32xf32>
    %295 = arith.addf %294, %14 : vector<2x32xf32>
    %296 = arith.negf %295 : vector<2x32xf32>
    %297 = math.exp %296 : vector<2x32xf32>
    %cst_64 = arith.constant 1.000000e+00 : f32
    %298 = vector.broadcast %cst_64 : f32 to vector<2x32xf32>
    %299 = arith.addf %298, %297 : vector<2x32xf32>
    %300 = arith.divf %298, %299 : vector<2x32xf32>
    %301 = tpu.concatenate %265, %273 in 1 : vector<2x32xf32>, vector<2x32xf32> -> vector<2x64xf32>
    %cst_65 = arith.constant dense<0.000000e+00> : vector<2x32xf32>
    %302 = tpu.matmul %301, %4, %cst_65 {dimension_numbers = #tpu.dot_dimension_numbers<[1], [0], [0], [1], [0, 0, 1, 1], [], []>} : vector<2x64xf32>, vector<64x32xf32>, vector<2x32xf32> -> vector<2x32xf32>
    %303 = arith.addf %302, %20 : vector<2x32xf32>
    %304 = arith.negf %303 : vector<2x32xf32>
    %305 = math.exp %304 : vector<2x32xf32>
    %cst_66 = arith.constant 1.000000e+00 : f32
    %306 = vector.broadcast %cst_66 : f32 to vector<2x32xf32>
    %307 = arith.addf %306, %305 : vector<2x32xf32>
    %308 = arith.divf %306, %307 : vector<2x32xf32>
    %309 = arith.mulf %292, %265 : vector<2x32xf32>
    %cst_67 = arith.constant 1.000000e+00 : f32
    %310 = vector.broadcast %cst_67 : f32 to vector<2x32xf32>
    %311 = arith.subf %310, %292 : vector<2x32xf32>
    %312 = arith.mulf %311, %283 : vector<2x32xf32>
    %313 = arith.addf %309, %312 : vector<2x32xf32>
    %314 = arith.mulf %308, %273 : vector<2x32xf32>
    %315 = arith.addf %313, %314 : vector<2x32xf32>
    %316 = math.tanh %315 : vector<2x32xf32>
    %317 = arith.mulf %300, %273 : vector<2x32xf32>
    %cst_68 = arith.constant 1.000000e+00 : f32
    %318 = vector.broadcast %cst_68 : f32 to vector<2x32xf32>
    %319 = arith.subf %318, %300 : vector<2x32xf32>
    %320 = arith.mulf %319, %284 : vector<2x32xf32>
    %321 = arith.addf %317, %320 : vector<2x32xf32>
    %322 = arith.mulf %308, %265 : vector<2x32xf32>
    %323 = arith.addf %321, %322 : vector<2x32xf32>
    %324 = math.tanh %323 : vector<2x32xf32>
    %325 = arith.index_cast %c5_i32 : i32 to index
    %c0_69 = arith.constant 0 : index
    %c0_70 = arith.constant 0 : index
    %326 = vector.load %arg5[%325, %c0_69, %c0_70] : memref<8x2x32xf32, #tpu.memory_space<vmem>>, vector<1x2x32xf32>
    %327 = vector.shape_cast %326 : vector<1x2x32xf32> to vector<2x32xf32>
    %328 = vector.shape_cast %324 : vector<2x32xf32> to vector<1x2x32xf32>
    tpu.vector_store %arg5[%325, %c0_69, %c0_70], %328 {strides = array<i32>} : memref<8x2x32xf32, #tpu.memory_space<vmem>>, vector<1x2x32xf32>,
    %c6_i32 = arith.constant 6 : i32
    %c2_i32_71 = arith.constant 2 : i32
    %329 = arith.muli %c6_i32, %c2_i32_71 : i32
    %330 = arith.index_cast %329 : i32 to index
    %c0_72 = arith.constant 0 : index
    %331 = vector.load %arg8[%330, %c0_72] : memref<16x128xf32, #tpu.memory_space<vmem>>, vector<2x128xf32>
    %332 = vector.extract_strided_slice %331 {offsets = [0, 0], sizes = [2, 32], strides = [1, 1]} : vector<2x128xf32> to vector<2x32xf32>
    %333 = vector.extract_strided_slice %331 {offsets = [0, 32], sizes = [2, 32], strides = [1, 1]} : vector<2x128xf32> to vector<2x32xf32>
    %334 = vector.extract_strided_slice %331 {offsets = [0, 64], sizes = [2, 32], strides = [1, 1]} : vector<2x128xf32> to vector<2x32xf32>
    %335 = vector.extract_strided_slice %331 {offsets = [0, 96], sizes = [2, 32], strides = [1, 1]} : vector<2x128xf32> to vector<2x32xf32>
    %336 = arith.mulf %11, %316 : vector<2x32xf32>
    %337 = arith.addf %332, %336 : vector<2x32xf32>
    %338 = arith.addf %337, %8 : vector<2x32xf32>
    %339 = arith.negf %338 : vector<2x32xf32>
    %340 = math.exp %339 : vector<2x32xf32>
    %cst_73 = arith.constant 1.000000e+00 : f32
    %341 = vector.broadcast %cst_73 : f32 to vector<2x32xf32>
    %342 = arith.addf %341, %340 : vector<2x32xf32>
    %343 = arith.divf %341, %342 : vector<2x32xf32>
    %344 = arith.mulf %17, %316 : vector<2x32xf32>
    %345 = arith.addf %333, %344 : vector<2x32xf32>
    %346 = arith.addf %345, %14 : vector<2x32xf32>
    %347 = arith.negf %346 : vector<2x32xf32>
    %348 = math.exp %347 : vector<2x32xf32>
    %cst_74 = arith.constant 1.000000e+00 : f32
    %349 = vector.broadcast %cst_74 : f32 to vector<2x32xf32>
    %350 = arith.addf %349, %348 : vector<2x32xf32>
    %351 = arith.divf %349, %350 : vector<2x32xf32>
    %352 = tpu.concatenate %316, %324 in 1 : vector<2x32xf32>, vector<2x32xf32> -> vector<2x64xf32>
    %cst_75 = arith.constant dense<0.000000e+00> : vector<2x32xf32>
    %353 = tpu.matmul %352, %4, %cst_75 {dimension_numbers = #tpu.dot_dimension_numbers<[1], [0], [0], [1], [0, 0, 1, 1], [], []>} : vector<2x64xf32>, vector<64x32xf32>, vector<2x32xf32> -> vector<2x32xf32>
    %354 = arith.addf %353, %20 : vector<2x32xf32>
    %355 = arith.negf %354 : vector<2x32xf32>
    %356 = math.exp %355 : vector<2x32xf32>
    %cst_76 = arith.constant 1.000000e+00 : f32
    %357 = vector.broadcast %cst_76 : f32 to vector<2x32xf32>
    %358 = arith.addf %357, %356 : vector<2x32xf32>
    %359 = arith.divf %357, %358 : vector<2x32xf32>
    %360 = arith.mulf %343, %316 : vector<2x32xf32>
    %cst_77 = arith.constant 1.000000e+00 : f32
    %361 = vector.broadcast %cst_77 : f32 to vector<2x32xf32>
    %362 = arith.subf %361, %343 : vector<2x32xf32>
    %363 = arith.mulf %362, %334 : vector<2x32xf32>
    %364 = arith.addf %360, %363 : vector<2x32xf32>
    %365 = arith.mulf %359, %324 : vector<2x32xf32>
    %366 = arith.addf %364, %365 : vector<2x32xf32>
    %367 = math.tanh %366 : vector<2x32xf32>
    %368 = arith.mulf %351, %324 : vector<2x32xf32>
    %cst_78 = arith.constant 1.000000e+00 : f32
    %369 = vector.broadcast %cst_78 : f32 to vector<2x32xf32>
    %370 = arith.subf %369, %351 : vector<2x32xf32>
    %371 = arith.mulf %370, %335 : vector<2x32xf32>
    %372 = arith.addf %368, %371 : vector<2x32xf32>
    %373 = arith.mulf %359, %316 : vector<2x32xf32>
    %374 = arith.addf %372, %373 : vector<2x32xf32>
    %375 = math.tanh %374 : vector<2x32xf32>
    %376 = arith.index_cast %c6_i32 : i32 to index
    %c0_79 = arith.constant 0 : index
    %c0_80 = arith.constant 0 : index
    %377 = vector.load %arg5[%376, %c0_79, %c0_80] : memref<8x2x32xf32, #tpu.memory_space<vmem>>, vector<1x2x32xf32>
    %378 = vector.shape_cast %377 : vector<1x2x32xf32> to vector<2x32xf32>
    %379 = vector.shape_cast %375 : vector<2x32xf32> to vector<1x2x32xf32>
    tpu.vector_store %arg5[%376, %c0_79, %c0_80], %379 {strides = array<i32>} : memref<8x2x32xf32, #tpu.memory_space<vmem>>, vector<1x2x32xf32>,
    %c7_i32 = arith.constant 7 : i32
    %c2_i32_81 = arith.constant 2 : i32
    %380 = arith.muli %c7_i32, %c2_i32_81 : i32
    %381 = arith.index_cast %380 : i32 to index
    %c0_82 = arith.constant 0 : index
    %382 = vector.load %arg8[%381, %c0_82] : memref<16x128xf32, #tpu.memory_space<vmem>>, vector<2x128xf32>
    %383 = vector.extract_strided_slice %382 {offsets = [0, 0], sizes = [2, 32], strides = [1, 1]} : vector<2x128xf32> to vector<2x32xf32>
    %384 = vector.extract_strided_slice %382 {offsets = [0, 32], sizes = [2, 32], strides = [1, 1]} : vector<2x128xf32> to vector<2x32xf32>
    %385 = vector.extract_strided_slice %382 {offsets = [0, 64], sizes = [2, 32], strides = [1, 1]} : vector<2x128xf32> to vector<2x32xf32>
    %386 = vector.extract_strided_slice %382 {offsets = [0, 96], sizes = [2, 32], strides = [1, 1]} : vector<2x128xf32> to vector<2x32xf32>
    %387 = arith.mulf %11, %367 : vector<2x32xf32>
    %388 = arith.addf %383, %387 : vector<2x32xf32>
    %389 = arith.addf %388, %8 : vector<2x32xf32>
    %390 = arith.negf %389 : vector<2x32xf32>
    %391 = math.exp %390 : vector<2x32xf32>
    %cst_83 = arith.constant 1.000000e+00 : f32
    %392 = vector.broadcast %cst_83 : f32 to vector<2x32xf32>
    %393 = arith.addf %392, %391 : vector<2x32xf32>
    %394 = arith.divf %392, %393 : vector<2x32xf32>
    %395 = arith.mulf %17, %367 : vector<2x32xf32>
    %396 = arith.addf %384, %395 : vector<2x32xf32>
    %397 = arith.addf %396, %14 : vector<2x32xf32>
    %398 = arith.negf %397 : vector<2x32xf32>
    %399 = math.exp %398 : vector<2x32xf32>
    %cst_84 = arith.constant 1.000000e+00 : f32
    %400 = vector.broadcast %cst_84 : f32 to vector<2x32xf32>
    %401 = arith.addf %400, %399 : vector<2x32xf32>
    %402 = arith.divf %400, %401 : vector<2x32xf32>
    %403 = tpu.concatenate %367, %375 in 1 : vector<2x32xf32>, vector<2x32xf32> -> vector<2x64xf32>
    %cst_85 = arith.constant dense<0.000000e+00> : vector<2x32xf32>
    %404 = tpu.matmul %403, %4, %cst_85 {dimension_numbers = #tpu.dot_dimension_numbers<[1], [0], [0], [1], [0, 0, 1, 1], [], []>} : vector<2x64xf32>, vector<64x32xf32>, vector<2x32xf32> -> vector<2x32xf32>
    %405 = arith.addf %404, %20 : vector<2x32xf32>
    %406 = arith.negf %405 : vector<2x32xf32>
    %407 = math.exp %406 : vector<2x32xf32>
    %cst_86 = arith.constant 1.000000e+00 : f32
    %408 = vector.broadcast %cst_86 : f32 to vector<2x32xf32>
    %409 = arith.addf %408, %407 : vector<2x32xf32>
    %410 = arith.divf %408, %409 : vector<2x32xf32>
    %411 = arith.mulf %394, %367 : vector<2x32xf32>
    %cst_87 = arith.constant 1.000000e+00 : f32
    %412 = vector.broadcast %cst_87 : f32 to vector<2x32xf32>
    %413 = arith.subf %412, %394 : vector<2x32xf32>
    %414 = arith.mulf %413, %385 : vector<2x32xf32>
    %415 = arith.addf %411, %414 : vector<2x32xf32>
    %416 = arith.mulf %410, %375 : vector<2x32xf32>
    %417 = arith.addf %415, %416 : vector<2x32xf32>
    %418 = math.tanh %417 : vector<2x32xf32>
    %419 = arith.mulf %402, %375 : vector<2x32xf32>
    %cst_88 = arith.constant 1.000000e+00 : f32
    %420 = vector.broadcast %cst_88 : f32 to vector<2x32xf32>
    %421 = arith.subf %420, %402 : vector<2x32xf32>
    %422 = arith.mulf %421, %386 : vector<2x32xf32>
    %423 = arith.addf %419, %422 : vector<2x32xf32>
    %424 = arith.mulf %410, %367 : vector<2x32xf32>
    %425 = arith.addf %423, %424 : vector<2x32xf32>
    %426 = math.tanh %425 : vector<2x32xf32>
    %427 = arith.index_cast %c7_i32 : i32 to index
    %c0_89 = arith.constant 0 : index
    %c0_90 = arith.constant 0 : index
    %428 = vector.load %arg5[%427, %c0_89, %c0_90] : memref<8x2x32xf32, #tpu.memory_space<vmem>>, vector<1x2x32xf32>
    %429 = vector.shape_cast %428 : vector<1x2x32xf32> to vector<2x32xf32>
    %430 = vector.shape_cast %426 : vector<2x32xf32> to vector<1x2x32xf32>
    tpu.vector_store %arg5[%427, %c0_89, %c0_90], %430 {strides = array<i32>} : memref<8x2x32xf32, #tpu.memory_space<vmem>>, vector<1x2x32xf32>,
    %c8_i32 = arith.constant 8 : i32
    %c0_91 = arith.constant 0 : index
    %c0_92 = arith.constant 0 : index
    %431 = vector.load %arg6[%c0_91, %c0_92] : memref<2x32xf32, #tpu.memory_space<vmem>>, vector<2x32xf32>
    tpu.vector_store %arg6[%c0_91, %c0_92], %426 {strides = array<i32>} : memref<2x32xf32, #tpu.memory_space<vmem>>, vector<2x32xf32>,
    %c0_93 = arith.constant 0 : index
    %c0_94 = arith.constant 0 : index
    %432 = vector.load %arg7[%c0_93, %c0_94] : memref<2x32xf32, #tpu.memory_space<vmem>>, vector<2x32xf32>
    tpu.vector_store %arg7[%c0_93, %c0_94], %418 {strides = array<i32>} : memref<2x32xf32, #tpu.memory_space<vmem>>, vector<2x32xf32>,
    return
  }
  func.func @transform_0(%arg0: i32) -> (i32, i32) {
    %c0_i32 = arith.constant 0 : i32
    %c0_i32_0 = arith.constant 0 : i32
    %c0_i32_1 = arith.constant 0 : i32
    return %c0_i32, %c0_i32_0 : i32, i32
  }
  func.func @transform_1(%arg0: i32) -> (i32, i32) {
    %c0_i32 = arith.constant 0 : i32
    %c0_i32_0 = arith.constant 0 : i32
    %c0_i32_1 = arith.constant 0 : i32
    return %c0_i32, %c0_i32_0 : i32, i32
  }
  func.func @transform_2(%arg0: i32) -> (i32, i32) {
    %c0_i32 = arith.constant 0 : i32
    %c0_i32_0 = arith.constant 0 : i32
    %c0_i32_1 = arith.constant 0 : i32
    return %c0_i32, %c0_i32_0 : i32, i32
  }
  func.func @transform_3(%arg0: i32) -> (i32, i32) {
    %c0_i32 = arith.constant 0 : i32
    %c0_i32_0 = arith.constant 0 : i32
    %c0_i32_1 = arith.constant 0 : i32
    return %c0_i32, %c0_i32_0 : i32, i32
  }
  func.func @transform_4(%arg0: i32) -> (i32, i32, i32) {
    %c0_i32 = arith.constant 0 : i32
    %c0_i32_0 = arith.constant 0 : i32
    %c0_i32_1 = arith.constant 0 : i32
    %c0_i32_2 = arith.constant 0 : i32
    return %c0_i32, %c0_i32_0, %c0_i32_1 : i32, i32, i32
  }
  func.func @transform_5(%arg0: i32) -> (i32, i32) {
    %c0_i32 = arith.constant 0 : i32
    %c0_i32_0 = arith.constant 0 : i32
    %c0_i32_1 = arith.constant 0 : i32
    return %c0_i32, %c0_i32_0 : i32, i32
  }
  func.func @transform_6(%arg0: i32) -> (i32, i32) {
    %c0_i32 = arith.constant 0 : i32
    %c0_i32_0 = arith.constant 0 : i32
    %c0_i32_1 = arith.constant 0 : i32
    return %c0_i32, %c0_i32_0 : i32, i32
  }
}

</mosaic_0001>

<llo_original>
// kernel: tpu_custom_call.1
$region0: #{tpu_custom_call.1}
  #allocation0 [shape = 'u32[]', space=smem, size = 0x4, offset = 0x4, fixed_abs, tag = 'smem constant byte address 0x4 - core index']
  #allocation1 [shape = 'u32[144,128]{1,0:T(1,128)}', space=vmem, size = 0x12000, scoped, tag = 'internal scratch']
  #allocation2 [shape = 'f32[16,128]{1,0:T(8,128)}', space=vmem, size = 0x2000, scoped, tag = 'scratch operand']
  %s0 = inlined_call_operand.vmem [shape: f32[16,8], index: 0, kind: input, shape index: {}]
  %s1 = inlined_call_operand.vmem [shape: f32[8,128], index: 1, kind: input, shape index: {}]
  %s2 = inlined_call_operand.vmem [shape: f32[64,32], index: 2, kind: input, shape index: {}]
  %s3 = inlined_call_operand.vmem [shape: f32[5,32], index: 3, kind: input, shape index: {}]
  %s4 = inlined_call_operand.hbm [shape: f32[8,2,32], index: 4, kind: output, shape index: {0}]
  %s5 = inlined_call_operand.hbm [shape: f32[2,32], index: 5, kind: output, shape index: {1}]
  %s6 = inlined_call_operand.hbm [shape: f32[2,32], index: 6, kind: output, shape index: {2}]
  %7 = xla_tuple %s4, %s5, %s6
  %s8 = sld [smem:[#allocation0]]
  $region42: #{tpu_custom_call.1} parent=0
    _
  %s10 = ssub.s32 1, %s8
  %s11 = scalar_select 0, %s10, %s8
  $region1: #{tpu_custom_call.1} parent=0
    #allocation3 [shape = 'u8[8192]{0}', space=vmem, size = 0x2000, scoped, tag = 'output window, operand 0, single buffered']
    #allocation4 [shape = 's32[1]{0}', space=sflag, size = 0x4, scoped, tag = 'scoped memory for tpu_custom_call.1']
    #allocation5 [shape = 'u8[1024]{0}', space=vmem, size = 0x400, scoped, tag = 'output window, operand 1, single buffered']
    #allocation6 [shape = 's32[1]{0}', space=sflag, size = 0x4, scoped, tag = 'scoped memory for tpu_custom_call.1']
    #allocation7 [shape = 'u8[1024]{0}', space=vmem, size = 0x400, scoped, tag = 'output window, operand 2, single buffered']
    %12 = vsyncpa [#allocation4], 0
    %13 = vsyncpa [#allocation6], 0
    // Predicated region
    $region2: #{tpu_custom_call.1} parent=1 // pred_check
      _
    $region3: #{tpu_custom_call.1} parent=1 // pred_check_branch
      %15 = sbr.rel (0) target = $region5
    $region4: #{tpu_custom_call.1} parent=1 // pred_region
      _
    $region5: #{tpu_custom_call.1} parent=1 // pred_fallthru
      _
    // Predicated region
    $region6: #{tpu_custom_call.1} parent=1 // pred_check
      _
    $region7: #{tpu_custom_call.1} parent=1 // pred_check_branch
      %17 = sbr.rel (0) target = $region9
    $region8: #{tpu_custom_call.1} parent=1 // pred_region
      _
    $region9: #{tpu_custom_call.1} parent=1 // pred_fallthru
      _
    // Predicated region
    $region10: #{tpu_custom_call.1} parent=1 // pred_check
      _
    $region11: #{tpu_custom_call.1} parent=1 // pred_check_branch
      %19 = sbr.rel (0) target = $region13
    $region12: #{tpu_custom_call.1} parent=1 // pred_region
      _
    $region13: #{tpu_custom_call.1} parent=1 // pred_fallthru
      _
    // Predicated region
    $region14: #{tpu_custom_call.1} parent=1 // pred_check
      _
    $region15: #{tpu_custom_call.1} parent=1 // pred_check_branch
      %21 = sbr.rel (0) target = $region17
    $region16: #{tpu_custom_call.1} parent=1 // pred_region
      _
    $region17: #{tpu_custom_call.1} parent=1 // pred_fallthru
      _
    %v22 = vld [vmem:[%s0] sm:$0xff]
    %v23 = vld [vmem:[%s0 + $0x8] sm:$0xff]
    %v24 = vld [vmem:[%s1] sm:$0xff]
    %vm25 = vcmask 64512
    %v27 = vsel %vm25, %v22, 0
    %v30 = vsel %vm25, %v23, 0
    %32 = vmatprep.subr.mxu0 0.0
    %33 = vmatpush1.msra.mxu0 %v24
    %34 = vmatprep.subr.mxu0 0.0
    %35 = vmatpush1.msra.mxu0 0.0
    %36 = vmatprep.subr.mxu0 0.0
    %37 = vmatpush1.msra.mxu0 0.0
    %38 = vmatprep.subr.mxu0 0.0
    %39 = vmatpush1.msra.mxu0 0.0
    %40 = vmatprep.subr.mxu0 0.0
    %41 = vmatpush1.msra.mxu0 0.0
    %42 = vmatprep.subr.mxu0 0.0
    %43 = vmatpush1.msra.mxu0 0.0
    %44 = vmatprep.subr.mxu0 0.0
    %45 = vmatpush1.msra.mxu0 0.0
    %46 = vmatprep.subr.mxu0 0.0
    %47 = vmatpush1.msra.mxu0 0.0
    %48 = vmatprep.subr.mxu0 0.0
    %49 = vmatpush1.msra.mxu0 0.0
    %50 = vmatprep.subr.mxu0 0.0
    %51 = vmatpush1.msra.mxu0 0.0
    %52 = vmatprep.subr.mxu0 0.0
    %53 = vmatpush1.msra.mxu0 0.0
    %54 = vmatprep.subr.mxu0 0.0
    %55 = vmatpush1.msra.mxu0 0.0
    %56 = vmatprep.subr.mxu0 0.0
    %57 = vmatpush1.msra.mxu0 0.0
    %58 = vmatprep.subr.mxu0 0.0
    %59 = vmatpush1.msra.mxu0 0.0
    %60 = vmatprep.subr.mxu0 0.0
    %61 = vmatpush1.msra.mxu0 0.0
    %62 = vmatprep.subr.mxu0 0.0
    %63 = vmatpush1.msra.mxu0 0.0
    %64 = vmatprep.subr.mxu0 0.0
    %65 = vmatpush1.msra.mxu0 0.0
    %66 = vmatprep.subr.mxu0 0.0
    %67 = vmatpush1.msra.mxu0 0.0
    %68 = vmatprep.subr.mxu0 0.0
    %69 = vmatpush1.msra.mxu0 0.0
    %70 = vmatprep.subr.mxu0 0.0
    %71 = vmatpush1.msra.mxu0 0.0
    %72 = vmatprep.subr.mxu0 0.0
    %73 = vmatpush1.msra.mxu0 0.0
    %74 = vmatprep.subr.mxu0 0.0
    %75 = vmatpush1.msra.mxu0 0.0
    %76 = vmatprep.subr.mxu0 0.0
    %77 = vmatpush1.msra.mxu0 0.0
    %78 = vmatprep.subr.mxu0 0.0
    %79 = vmatpush1.msra.mxu0 0.0
    %80 = vmatprep.subr.mxu0 0.0
    %81 = vmatpush1.msra.mxu0 0.0
    %82 = vmatprep.subr.mxu0 0.0
    %83 = vmatpush1.msra.mxu0 0.0
    %84 = vmatprep.subr.mxu0 0.0
    %85 = vmatpush1.msra.mxu0 0.0
    %86 = vmatprep.subr.mxu0 0.0
    %87 = vmatpush1.msra.mxu0 0.0
    %88 = vmatprep.subr.mxu0 0.0
    %89 = vmatpush1.msra.mxu0 0.0
    %90 = vmatprep.subr.mxu0 0.0
    %91 = vmatpush1.msra.mxu0 0.0
    %92 = vmatprep.subr.mxu0 0.0
    %93 = vmatpush1.msra.mxu0 0.0
    %94 = vmatprep.subr.mxu0 0.0
    %95 = vmatpush1.msra.mxu0 0.0
    %96 = vmatprep.mubr.f32.mxu0 0.0
    %97 = vmatmul.mubr.f32.gmra.mrb[0].mxu0 %v27
    %v98 = vpop.f32.mrb[0].mxu0
    %v99 = vadd.f32 0.0, %v98
    %v100 = vpop.f32.mrb[0].mxu0
    %101 = vmatprep.mubr.f32.mxu0 0.0
    %102 = vmatmul.mubr.f32.gmra.mrb[0].mxu0 %v30
    %v103 = vpop.f32.mrb[0].mxu0
    %v104 = vadd.f32 0.0, %v103
    %v105 = vpop.f32.mrb[0].mxu0
    %106 = vdwg.mxu0
    %107 = vst [vmem:[#allocation2] sm:$0xff] %v99
    %108 = vst [vmem:[#allocation2 + $0x8] sm:$0xff] %v104
    %v109 = vld [vmem:[%s2] sm:$0xff]
    %v110 = vld [vmem:[%s2 + $0x8] sm:$0xff]
    %v111 = vld [vmem:[%s2 + $0x10] sm:$0xff]
    %v112 = vld [vmem:[%s2 + $0x18] sm:$0xff]
    %v113 = vld [vmem:[%s2 + $0x20] sm:$0xff]
    %v114 = vld [vmem:[%s2 + $0x28] sm:$0xff]
    %v115 = vld [vmem:[%s2 + $0x30] sm:$0xff]
    %v116 = vld [vmem:[%s2 + $0x38] sm:$0xff]
    %v117 = vld [vmem:[%s3] sm:$0x1f]
    %v118 = vlaneseq
    %v119 = vshrl.u32 %v118, 7
    %v120 = vsub.s32 0, %v119
    %v121 = vrot.slane %v117, %v120
    %v122 = vlaneseq
    %v123 = vshrl.u32 %v122, 7
    %v124 = vsub.s32 1, %v123
    %v125 = vrot.slane %v117, %v124
    %v126 = vlaneseq
    %v127 = vshrl.u32 %v126, 7
    %v128 = vsub.s32 2, %v127
    %v129 = vrot.slane %v117, %v128
    %v130 = vlaneseq
    %v131 = vshrl.u32 %v130, 7
    %v132 = vsub.s32 3, %v131
    %v133 = vrot.slane %v117, %v132
    %v134 = vlaneseq
    %v135 = vshrl.u32 %v134, 7
    %v136 = vsub.s32 4, %v135
    %v137 = vrot.slane %v117, %v136
    %v138 = vld [vmem:[#allocation2] sm:$0x3]
    %v139 = vmul.f32 %v125, 0.0
    %v140 = vadd.f32 %v138, %v139
    %v141 = vadd.f32 %v140, %v121
    %v142 = vxor.u32 %v141, 2147483648
    %v143 = vmul.f32 %v142, 1.442695
    %v144 = vpow.pop %v143
    %v145 = vadd.f32 %v144, 1.0
    %v146 = vrcp.pop %v145
    %v147 = vmul.f32 1.0, %v146
    %v148 = vmul.f32 %v133, 0.0
    %150 = vrot.lane.b32.xlu0 %v148, 32
    %v151 = vpop.permute.xlu0 %150
    %v153 = vadd.f32 %v138, %v151
    %155 = vrot.lane.b32.xlu0 %v129, 32
    %v156 = vpop.permute.xlu0 %155
    %v158 = vadd.f32 %v153, %v156
    %v159 = vxor.u32 %v158, 2147483648
    %v160 = vmul.f32 %v159, 1.442695
    %v161 = vpow.pop %v160
    %v162 = vadd.f32 %v161, 1.0
    %v163 = vrcp.pop %v162
    %v164 = vmul.f32 1.0, %v163
    %vm165 = vcmask 523264
    %v167 = vsel %vm165, 0.0, 0
    %169 = vmatprep.subr.mxu0 0.0
    %170 = vmatpush1.msra.mxu0 %v109
    %171 = vmatprep.subr.mxu0 0.0
    %172 = vmatpush1.msra.mxu0 %v110
    %173 = vmatprep.subr.mxu0 0.0
    %174 = vmatpush1.msra.mxu0 %v111
    %175 = vmatprep.subr.mxu0 0.0
    %176 = vmatpush1.msra.mxu0 %v112
    %177 = vmatprep.subr.mxu0 0.0
    %178 = vmatpush1.msra.mxu0 %v113
    %179 = vmatprep.subr.mxu0 0.0
    %180 = vmatpush1.msra.mxu0 %v114
    %181 = vmatprep.subr.mxu0 0.0
    %182 = vmatpush1.msra.mxu0 %v115
    %183 = vmatprep.subr.mxu0 0.0
    %184 = vmatpush1.msra.mxu0 %v116
    %185 = vmatprep.subr.mxu0 0.0
    %186 = vmatpush1.msra.mxu0 0.0
    %187 = vmatprep.subr.mxu0 0.0
    %188 = vmatpush1.msra.mxu0 0.0
    %189 = vmatprep.subr.mxu0 0.0
    %190 = vmatpush1.msra.mxu0 0.0
    %191 = vmatprep.subr.mxu0 0.0
    %192 = vmatpush1.msra.mxu0 0.0
    %193 = vmatprep.subr.mxu0 0.0
    %194 = vmatpush1.msra.mxu0 0.0
    %195 = vmatprep.subr.mxu0 0.0
    %196 = vmatpush1.msra.mxu0 0.0
    %197 = vmatprep.subr.mxu0 0.0
    %198 = vmatpush1.msra.mxu0 0.0
    %199 = vmatprep.subr.mxu0 0.0
    %200 = vmatpush1.msra.mxu0 0.0
    %201 = vmatprep.subr.mxu0 0.0
    %202 = vmatpush1.msra.mxu0 0.0
    %203 = vmatprep.subr.mxu0 0.0
    %204 = vmatpush1.msra.mxu0 0.0
    %205 = vmatprep.subr.mxu0 0.0
    %206 = vmatpush1.msra.mxu0 0.0
    %207 = vmatprep.subr.mxu0 0.0
    %208 = vmatpush1.msra.mxu0 0.0
    %209 = vmatprep.subr.mxu0 0.0
    %210 = vmatpush1.msra.mxu0 0.0
    %211 = vmatprep.subr.mxu0 0.0
    %212 = vmatpush1.msra.mxu0 0.0
    %213 = vmatprep.subr.mxu0 0.0
    %214 = vmatpush1.msra.mxu0 0.0
    %215 = vmatprep.subr.mxu0 0.0
    %216 = vmatpush1.msra.mxu0 0.0
    %217 = vmatprep.subr.mxu0 0.0
    %218 = vmatpush1.msra.mxu0 0.0
    %219 = vmatprep.subr.mxu0 0.0
    %220 = vmatpush1.msra.mxu0 0.0
    %221 = vmatprep.subr.mxu0 0.0
    %222 = vmatpush1.msra.mxu0 0.0
    %223 = vmatprep.subr.mxu0 0.0
    %224 = vmatpush1.msra.mxu0 0.0
    %225 = vmatprep.subr.mxu0 0.0
    %226 = vmatpush1.msra.mxu0 0.0
    %227 = vmatprep.subr.mxu0 0.0
    %228 = vmatpush1.msra.mxu0 0.0
    %229 = vmatprep.subr.mxu0 0.0
    %230 = vmatpush1.msra.mxu0 0.0
    %231 = vmatprep.subr.mxu0 0.0
    %232 = vmatpush1.msra.mxu0 0.0
    %233 = vmatprep.mubr.f32.mxu0 0.0
    %234 = vmatmul.mubr.f32.gmra.mrb[0].mxu0 %v167
    %v235 = vpop.f32.mrb[0].mxu0
    %v236 = vadd.f32 %v137, %v235
    %v237 = vpop.f32.mrb[0].mxu0
    %238 = vdwg.mxu0
    %v239 = vxor.u32 %v236, 2147483648
    %v240 = vmul.f32 %v239, 1.442695
    %v241 = vpow.pop %v240
    %v242 = vadd.f32 %v241, 1.0
    %v243 = vrcp.pop %v242
    %v244 = vmul.f32 1.0, %v243
    %v245 = vmul.f32 %v147, 0.0
    %v246 = vsub.f32 1.0, %v147
    %248 = vrot.lane.b32.xlu0 %v138, 64
    %v249 = vpop.permute.xlu0 %248
    %v251 = vmul.f32 %v246, %v249
    %v252 = vadd.f32 %v245, %v251
    %v253 = vmul.f32 %v244, 0.0
    %v254 = vadd.f32 %v252, %v253
    %v255 = vtanh.pop %v254
    %v256 = vmul.f32 %v164, 0.0
    %v257 = vsub.f32 1.0, %v164
    %v258 = vmul.f32 %v257, %v249
    %v259 = vadd.f32 %v256, %v258
    %261 = vrot.lane.b32.xlu0 %v253, 32
    %v262 = vpop.permute.xlu0 %261
    %v264 = vadd.f32 %v259, %v262
    %v265 = vtanh.pop %v264
    %267 = vrot.lane.b32.xlu0 %v265, 96
    %v268 = vpop.permute.xlu0 %267
    %vm270 = vcmask 254976
    %271 = vst.msk [vmem:[#allocation3] sm:$0x3] %vm270, %v268
    %v272 = vld [vmem:[#allocation2 + $0x2] sm:$0x3]
    %v273 = vmul.f32 %v125, %v255
    %v274 = vadd.f32 %v272, %v273
    %v275 = vadd.f32 %v274, %v121
    %v276 = vxor.u32 %v275, 2147483648
    %v277 = vmul.f32 %v276, 1.442695
    %v278 = vpow.pop %v277
    %v279 = vadd.f32 %v278, 1.0
    %v280 = vrcp.pop %v279
    %v281 = vmul.f32 1.0, %v280
    %v282 = vmul.f32 %v133, %v255
    %284 = vrot.lane.b32.xlu0 %v282, 32
    %v285 = vpop.permute.xlu0 %284
    %v287 = vadd.f32 %v272, %v285
    %v288 = vadd.f32 %v287, %v156
    %v289 = vxor.u32 %v288, 2147483648
    %v290 = vmul.f32 %v289, 1.442695
    %v291 = vpow.pop %v290
    %v292 = vadd.f32 %v291, 1.0
    %v293 = vrcp.pop %v292
    %v294 = vmul.f32 1.0, %v293
    %vm295 = vcmask 261120
    %v296 = vsel %vm295, %v255, %v265
    %v298 = vsel %vm165, %v296, 0
    %300 = vmatprep.subr.mxu0 0.0
    %301 = vmatpush1.msra.mxu0 %v109
    %302 = vmatprep.subr.mxu0 0.0
    %303 = vmatpush1.msra.mxu0 %v110
    %304 = vmatprep.subr.mxu0 0.0
    %305 = vmatpush1.msra.mxu0 %v111
    %306 = vmatprep.subr.mxu0 0.0
    %307 = vmatpush1.msra.mxu0 %v112
    %308 = vmatprep.subr.mxu0 0.0
    %309 = vmatpush1.msra.mxu0 %v113
    %310 = vmatprep.subr.mxu0 0.0
    %311 = vmatpush1.msra.mxu0 %v114
    %312 = vmatprep.subr.mxu0 0.0
    %313 = vmatpush1.msra.mxu0 %v115
    %314 = vmatprep.subr.mxu0 0.0
    %315 = vmatpush1.msra.mxu0 %v116
    %316 = vmatprep.subr.mxu0 0.0
    %317 = vmatpush1.msra.mxu0 0.0
    %318 = vmatprep.subr.mxu0 0.0
    %319 = vmatpush1.msra.mxu0 0.0
    %320 = vmatprep.subr.mxu0 0.0
    %321 = vmatpush1.msra.mxu0 0.0
    %322 = vmatprep.subr.mxu0 0.0
    %323 = vmatpush1.msra.mxu0 0.0
    %324 = vmatprep.subr.mxu0 0.0
    %325 = vmatpush1.msra.mxu0 0.0
    %326 = vmatprep.subr.mxu0 0.0
    %327 = vmatpush1.msra.mxu0 0.0
    %328 = vmatprep.subr.mxu0 0.0
    %329 = vmatpush1.msra.mxu0 0.0
    %330 = vmatprep.subr.mxu0 0.0
    %331 = vmatpush1.msra.mxu0 0.0
    %332 = vmatprep.subr.mxu0 0.0
    %333 = vmatpush1.msra.mxu0 0.0
    %334 = vmatprep.subr.mxu0 0.0
    %335 = vmatpush1.msra.mxu0 0.0
    %336 = vmatprep.subr.mxu0 0.0
    %337 = vmatpush1.msra.mxu0 0.0
    %338 = vmatprep.subr.mxu0 0.0
    %339 = vmatpush1.msra.mxu0 0.0
    %340 = vmatprep.subr.mxu0 0.0
    %341 = vmatpush1.msra.mxu0 0.0
    %342 = vmatprep.subr.mxu0 0.0
    %343 = vmatpush1.msra.mxu0 0.0
    %344 = vmatprep.subr.mxu0 0.0
    %345 = vmatpush1.msra.mxu0 0.0
    %346 = vmatprep.subr.mxu0 0.0
    %347 = vmatpush1.msra.mxu0 0.0
    %348 = vmatprep.subr.mxu0 0.0
    %349 = vmatpush1.msra.mxu0 0.0
    %350 = vmatprep.subr.mxu0 0.0
    %351 = vmatpush1.msra.mxu0 0.0
    %352 = vmatprep.subr.mxu0 0.0
    %353 = vmatpush1.msra.mxu0 0.0
    %354 = vmatprep.subr.mxu0 0.0
    %355 = vmatpush1.msra.mxu0 0.0
    %356 = vmatprep.subr.mxu0 0.0
    %357 = vmatpush1.msra.mxu0 0.0
    %358 = vmatprep.subr.mxu0 0.0
    %359 = vmatpush1.msra.mxu0 0.0
    %360 = vmatprep.subr.mxu0 0.0
    %361 = vmatpush1.msra.mxu0 0.0
    %362 = vmatprep.subr.mxu0 0.0
    %363 = vmatpush1.msra.mxu0 0.0
    %364 = vmatprep.mubr.f32.mxu0 0.0
    %365 = vmatmul.mubr.f32.gmra.mrb[0].mxu0 %v298
    %v366 = vpop.f32.mrb[0].mxu0
    %v367 = vadd.f32 %v137, %v366
    %v368 = vpop.f32.mrb[0].mxu0
    %369 = vdwg.mxu0
    %v370 = vxor.u32 %v367, 2147483648
    %v371 = vmul.f32 %v370, 1.442695
    %v372 = vpow.pop %v371
    %v373 = vadd.f32 %v372, 1.0
    %v374 = vrcp.pop %v373
    %v375 = vmul.f32 1.0, %v374
    %v376 = vmul.f32 %v281, %v255
    %v377 = vsub.f32 1.0, %v281
    %379 = vrot.lane.b32.xlu0 %v272, 64
    %v380 = vpop.permute.xlu0 %379
    %v382 = vmul.f32 %v377, %v380
    %v383 = vadd.f32 %v376, %v382
    %v384 = vmul.f32 %v375, %v268
    %v385 = vadd.f32 %v383, %v384
    %v386 = vtanh.pop %v385
    %v387 = vmul.f32 %v294, %v265
    %v388 = vsub.f32 1.0, %v294
    %v389 = vmul.f32 %v388, %v380
    %v390 = vadd.f32 %v387, %v389
    %v391 = vmul.f32 %v375, %v255
    %393 = vrot.lane.b32.xlu0 %v391, 32
    %v394 = vpop.permute.xlu0 %393
    %v396 = vadd.f32 %v390, %v394
    %v397 = vtanh.pop %v396
    %399 = vrot.lane.b32.xlu0 %v397, 96
    %v400 = vpop.permute.xlu0 %399
    %s402 = scalar_lea.vmem [#allocation3], 2
    %403 = vst.msk [vmem:[%s402] sm:$0x3] %vm270, %v400
    %v404 = vld [vmem:[#allocation2 + $0x4] sm:$0x3]
    %v405 = vmul.f32 %v125, %v386
    %v406 = vadd.f32 %v404, %v405
    %v407 = vadd.f32 %v406, %v121
    %v408 = vxor.u32 %v407, 2147483648
    %v409 = vmul.f32 %v408, 1.442695
    %v410 = vpow.pop %v409
    %v411 = vadd.f32 %v410, 1.0
    %v412 = vrcp.pop %v411
    %v413 = vmul.f32 1.0, %v412
    %v414 = vmul.f32 %v133, %v386
    %416 = vrot.lane.b32.xlu0 %v414, 32
    %v417 = vpop.permute.xlu0 %416
    %v419 = vadd.f32 %v404, %v417
    %v420 = vadd.f32 %v419, %v156
    %v421 = vxor.u32 %v420, 2147483648
    %v422 = vmul.f32 %v421, 1.442695
    %v423 = vpow.pop %v422
    %v424 = vadd.f32 %v423, 1.0
    %v425 = vrcp.pop %v424
    %v426 = vmul.f32 1.0, %v425
    %v427 = vsel %vm295, %v386, %v397
    %v429 = vsel %vm165, %v427, 0
    %431 = vmatprep.subr.mxu0 0.0
    %432 = vmatpush1.msra.mxu0 %v109
    %433 = vmatprep.subr.mxu0 0.0
    %434 = vmatpush1.msra.mxu0 %v110
    %435 = vmatprep.subr.mxu0 0.0
    %436 = vmatpush1.msra.mxu0 %v111
    %437 = vmatprep.subr.mxu0 0.0
    %438 = vmatpush1.msra.mxu0 %v112
    %439 = vmatprep.subr.mxu0 0.0
    %440 = vmatpush1.msra.mxu0 %v113
    %441 = vmatprep.subr.mxu0 0.0
    %442 = vmatpush1.msra.mxu0 %v114
    %443 = vmatprep.subr.mxu0 0.0
    %444 = vmatpush1.msra.mxu0 %v115
    %445 = vmatprep.subr.mxu0 0.0
    %446 = vmatpush1.msra.mxu0 %v116
    %447 = vmatprep.subr.mxu0 0.0
    %448 = vmatpush1.msra.mxu0 0.0
    %449 = vmatprep.subr.mxu0 0.0
    %450 = vmatpush1.msra.mxu0 0.0
    %451 = vmatprep.subr.mxu0 0.0
    %452 = vmatpush1.msra.mxu0 0.0
    %453 = vmatprep.subr.mxu0 0.0
    %454 = vmatpush1.msra.mxu0 0.0
    %455 = vmatprep.subr.mxu0 0.0
    %456 = vmatpush1.msra.mxu0 0.0
    %457 = vmatprep.subr.mxu0 0.0
    %458 = vmatpush1.msra.mxu0 0.0
    %459 = vmatprep.subr.mxu0 0.0
    %460 = vmatpush1.msra.mxu0 0.0
    %461 = vmatprep.subr.mxu0 0.0
    %462 = vmatpush1.msra.mxu0 0.0
    %463 = vmatprep.subr.mxu0 0.0
    %464 = vmatpush1.msra.mxu0 0.0
    %465 = vmatprep.subr.mxu0 0.0
    %466 = vmatpush1.msra.mxu0 0.0
    %467 = vmatprep.subr.mxu0 0.0
    %468 = vmatpush1.msra.mxu0 0.0
    %469 = vmatprep.subr.mxu0 0.0
    %470 = vmatpush1.msra.mxu0 0.0
    %471 = vmatprep.subr.mxu0 0.0
    %472 = vmatpush1.msra.mxu0 0.0
    %473 = vmatprep.subr.mxu0 0.0
    %474 = vmatpush1.msra.mxu0 0.0
    %475 = vmatprep.subr.mxu0 0.0
    %476 = vmatpush1.msra.mxu0 0.0
    %477 = vmatprep.subr.mxu0 0.0
    %478 = vmatpush1.msra.mxu0 0.0
    %479 = vmatprep.subr.mxu0 0.0
    %480 = vmatpush1.msra.mxu0 0.0
    %481 = vmatprep.subr.mxu0 0.0
    %482 = vmatpush1.msra.mxu0 0.0
    %483 = vmatprep.subr.mxu0 0.0
    %484 = vmatpush1.msra.mxu0 0.0
    %485 = vmatprep.subr.mxu0 0.0
    %486 = vmatpush1.msra.mxu0 0.0
    %487 = vmatprep.subr.mxu0 0.0
    %488 = vmatpush1.msra.mxu0 0.0
    %489 = vmatprep.subr.mxu0 0.0
    %490 = vmatpush1.msra.mxu0 0.0
    %491 = vmatprep.subr.mxu0 0.0
    %492 = vmatpush1.msra.mxu0 0.0
    %493 = vmatprep.subr.mxu0 0.0
    %494 = vmatpush1.msra.mxu0 0.0
    %495 = vmatprep.mubr.f32.mxu0 0.0
    %496 = vmatmul.mubr.f32.gmra.mrb[0].mxu0 %v429
    %v497 = vpop.f32.mrb[0].mxu0
    %v498 = vadd.f32 %v137, %v497
    %v499 = vpop.f32.mrb[0].mxu0
    %500 = vdwg.mxu0
    %v501 = vxor.u32 %v498, 2147483648
    %v502 = vmul.f32 %v501, 1.442695
    %v503 = vpow.pop %v502
    %v504 = vadd.f32 %v503, 1.0
    %v505 = vrcp.pop %v504
    %v506 = vmul.f32 1.0, %v505
    %v507 = vmul.f32 %v413, %v386
    %v508 = vsub.f32 1.0, %v413
    %510 = vrot.lane.b32.xlu0 %v404, 64
    %v511 = vpop.permute.xlu0 %510
    %v513 = vmul.f32 %v508, %v511
    %v514 = vadd.f32 %v507, %v513
    %v515 = vmul.f32 %v506, %v400
    %v516 = vadd.f32 %v514, %v515
    %v517 = vtanh.pop %v516
    %v518 = vmul.f32 %v426, %v397
    %v519 = vsub.f32 1.0, %v426
    %v520 = vmul.f32 %v519, %v511
    %v521 = vadd.f32 %v518, %v520
    %v522 = vmul.f32 %v506, %v386
    %524 = vrot.lane.b32.xlu0 %v522, 32
    %v525 = vpop.permute.xlu0 %524
    %v527 = vadd.f32 %v521, %v525
    %v528 = vtanh.pop %v527
    %530 = vrot.lane.b32.xlu0 %v528, 96
    %v531 = vpop.permute.xlu0 %530
    %s533 = scalar_lea.vmem [#allocation3], 4
    %534 = vst.msk [vmem:[%s533] sm:$0x3] %vm270, %v531
    %v535 = vld [vmem:[#allocation2 + $0x6] sm:$0x3]
    %v536 = vmul.f32 %v125, %v517
    %v537 = vadd.f32 %v535, %v536
    %v538 = vadd.f32 %v537, %v121
    %v539 = vxor.u32 %v538, 2147483648
    %v540 = vmul.f32 %v539, 1.442695
    %v541 = vpow.pop %v540
    %v542 = vadd.f32 %v541, 1.0
    %v543 = vrcp.pop %v542
    %v544 = vmul.f32 1.0, %v543
    %v545 = vmul.f32 %v133, %v517
    %547 = vrot.lane.b32.xlu0 %v545, 32
    %v548 = vpop.permute.xlu0 %547
    %v550 = vadd.f32 %v535, %v548
    %v551 = vadd.f32 %v550, %v156
    %v552 = vxor.u32 %v551, 2147483648
    %v553 = vmul.f32 %v552, 1.442695
    %v554 = vpow.pop %v553
    %v555 = vadd.f32 %v554, 1.0
    %v556 = vrcp.pop %v555
    %v557 = vmul.f32 1.0, %v556
    %v558 = vsel %vm295, %v517, %v528
    %v560 = vsel %vm165, %v558, 0
    %562 = vmatprep.subr.mxu0 0.0
    %563 = vmatpush1.msra.mxu0 %v109
    %564 = vmatprep.subr.mxu0 0.0
    %565 = vmatpush1.msra.mxu0 %v110
    %566 = vmatprep.subr.mxu0 0.0
    %567 = vmatpush1.msra.mxu0 %v111
    %568 = vmatprep.subr.mxu0 0.0
    %569 = vmatpush1.msra.mxu0 %v112
    %570 = vmatprep.subr.mxu0 0.0
    %571 = vmatpush1.msra.mxu0 %v113
    %572 = vmatprep.subr.mxu0 0.0
    %573 = vmatpush1.msra.mxu0 %v114
    %574 = vmatprep.subr.mxu0 0.0
    %575 = vmatpush1.msra.mxu0 %v115
    %576 = vmatprep.subr.mxu0 0.0
    %577 = vmatpush1.msra.mxu0 %v116
    %578 = vmatprep.subr.mxu0 0.0
    %579 = vmatpush1.msra.mxu0 0.0
    %580 = vmatprep.subr.mxu0 0.0
    %581 = vmatpush1.msra.mxu0 0.0
    %582 = vmatprep.subr.mxu0 0.0
    %583 = vmatpush1.msra.mxu0 0.0
    %584 = vmatprep.subr.mxu0 0.0
    %585 = vmatpush1.msra.mxu0 0.0
    %586 = vmatprep.subr.mxu0 0.0
    %587 = vmatpush1.msra.mxu0 0.0
    %588 = vmatprep.subr.mxu0 0.0
    %589 = vmatpush1.msra.mxu0 0.0
    %590 = vmatprep.subr.mxu0 0.0
    %591 = vmatpush1.msra.mxu0 0.0
    %592 = vmatprep.subr.mxu0 0.0
    %593 = vmatpush1.msra.mxu0 0.0
    %594 = vmatprep.subr.mxu0 0.0
    %595 = vmatpush1.msra.mxu0 0.0
    %596 = vmatprep.subr.mxu0 0.0
    %597 = vmatpush1.msra.mxu0 0.0
    %598 = vmatprep.subr.mxu0 0.0
    %599 = vmatpush1.msra.mxu0 0.0
    %600 = vmatprep.subr.mxu0 0.0
    %601 = vmatpush1.msra.mxu0 0.0
    %602 = vmatprep.subr.mxu0 0.0
    %603 = vmatpush1.msra.mxu0 0.0
    %604 = vmatprep.subr.mxu0 0.0
    %605 = vmatpush1.msra.mxu0 0.0
    %606 = vmatprep.subr.mxu0 0.0
    %607 = vmatpush1.msra.mxu0 0.0
    %608 = vmatprep.subr.mxu0 0.0
    %609 = vmatpush1.msra.mxu0 0.0
    %610 = vmatprep.subr.mxu0 0.0
    %611 = vmatpush1.msra.mxu0 0.0
    %612 = vmatprep.subr.mxu0 0.0
    %613 = vmatpush1.msra.mxu0 0.0
    %614 = vmatprep.subr.mxu0 0.0
    %615 = vmatpush1.msra.mxu0 0.0
    %616 = vmatprep.subr.mxu0 0.0
    %617 = vmatpush1.msra.mxu0 0.0
    %618 = vmatprep.subr.mxu0 0.0
    %619 = vmatpush1.msra.mxu0 0.0
    %620 = vmatprep.subr.mxu0 0.0
    %621 = vmatpush1.msra.mxu0 0.0
    %622 = vmatprep.subr.mxu0 0.0
    %623 = vmatpush1.msra.mxu0 0.0
    %624 = vmatprep.subr.mxu0 0.0
    %625 = vmatpush1.msra.mxu0 0.0
    %626 = vmatprep.mubr.f32.mxu0 0.0
    %627 = vmatmul.mubr.f32.gmra.mrb[0].mxu0 %v560
    %v628 = vpop.f32.mrb[0].mxu0
    %v629 = vadd.f32 %v137, %v628
    %v630 = vpop.f32.mrb[0].mxu0
    %631 = vdwg.mxu0
    %v632 = vxor.u32 %v629, 2147483648
    %v633 = vmul.f32 %v632, 1.442695
    %v634 = vpow.pop %v633
    %v635 = vadd.f32 %v634, 1.0
    %v636 = vrcp.pop %v635
    %v637 = vmul.f32 1.0, %v636
    %v638 = vmul.f32 %v544, %v517
    %v639 = vsub.f32 1.0, %v544
    %641 = vrot.lane.b32.xlu0 %v535, 64
    %v642 = vpop.permute.xlu0 %641
    %v644 = vmul.f32 %v639, %v642
    %v645 = vadd.f32 %v638, %v644
    %v646 = vmul.f32 %v637, %v531
    %v647 = vadd.f32 %v645, %v646
    %v648 = vtanh.pop %v647
    %v649 = vmul.f32 %v557, %v528
    %v650 = vsub.f32 1.0, %v557
    %v651 = vmul.f32 %v650, %v642
    %v652 = vadd.f32 %v649, %v651
    %v653 = vmul.f32 %v637, %v517
    %655 = vrot.lane.b32.xlu0 %v653, 32
    %v656 = vpop.permute.xlu0 %655
    %v658 = vadd.f32 %v652, %v656
    %v659 = vtanh.pop %v658
    %661 = vrot.lane.b32.xlu0 %v659, 96
    %v662 = vpop.permute.xlu0 %661
    %s664 = scalar_lea.vmem [#allocation3], 6
    %665 = vst.msk [vmem:[%s664] sm:$0x3] %vm270, %v662
    %v666 = vld [vmem:[#allocation2 + $0x8] sm:$0x3]
    %v667 = vmul.f32 %v125, %v648
    %v668 = vadd.f32 %v666, %v667
    %v669 = vadd.f32 %v668, %v121
    %v670 = vxor.u32 %v669, 2147483648
    %v671 = vmul.f32 %v670, 1.442695
    %v672 = vpow.pop %v671
    %v673 = vadd.f32 %v672, 1.0
    %v674 = vrcp.pop %v673
    %v675 = vmul.f32 1.0, %v674
    %v676 = vmul.f32 %v133, %v648
    %678 = vrot.lane.b32.xlu0 %v676, 32
    %v679 = vpop.permute.xlu0 %678
    %v681 = vadd.f32 %v666, %v679
    %v682 = vadd.f32 %v681, %v156
    %v683 = vxor.u32 %v682, 2147483648
    %v684 = vmul.f32 %v683, 1.442695
    %v685 = vpow.pop %v684
    %v686 = vadd.f32 %v685, 1.0
    %v687 = vrcp.pop %v686
    %v688 = vmul.f32 1.0, %v687
    %v689 = vsel %vm295, %v648, %v659
    %v691 = vsel %vm165, %v689, 0
    %693 = vmatprep.subr.mxu0 0.0
    %694 = vmatpush1.msra.mxu0 %v109
    %695 = vmatprep.subr.mxu0 0.0
    %696 = vmatpush1.msra.mxu0 %v110
    %697 = vmatprep.subr.mxu0 0.0
    %698 = vmatpush1.msra.mxu0 %v111
    %699 = vmatprep.subr.mxu0 0.0
    %700 = vmatpush1.msra.mxu0 %v112
    %701 = vmatprep.subr.mxu0 0.0
    %702 = vmatpush1.msra.mxu0 %v113
    %703 = vmatprep.subr.mxu0 0.0
    %704 = vmatpush1.msra.mxu0 %v114
    %705 = vmatprep.subr.mxu0 0.0
    %706 = vmatpush1.msra.mxu0 %v115
    %707 = vmatprep.subr.mxu0 0.0
    %708 = vmatpush1.msra.mxu0 %v116
    %709 = vmatprep.subr.mxu0 0.0
    %710 = vmatpush1.msra.mxu0 0.0
    %711 = vmatprep.subr.mxu0 0.0
    %712 = vmatpush1.msra.mxu0 0.0
    %713 = vmatprep.subr.mxu0 0.0
    %714 = vmatpush1.msra.mxu0 0.0
    %715 = vmatprep.subr.mxu0 0.0
    %716 = vmatpush1.msra.mxu0 0.0
    %717 = vmatprep.subr.mxu0 0.0
    %718 = vmatpush1.msra.mxu0 0.0
    %719 = vmatprep.subr.mxu0 0.0
    %720 = vmatpush1.msra.mxu0 0.0
    %721 = vmatprep.subr.mxu0 0.0
    %722 = vmatpush1.msra.mxu0 0.0
    %723 = vmatprep.subr.mxu0 0.0
    %724 = vmatpush1.msra.mxu0 0.0
    %725 = vmatprep.subr.mxu0 0.0
    %726 = vmatpush1.msra.mxu0 0.0
    %727 = vmatprep.subr.mxu0 0.0
    %728 = vmatpush1.msra.mxu0 0.0
    %729 = vmatprep.subr.mxu0 0.0
    %730 = vmatpush1.msra.mxu0 0.0
    %731 = vmatprep.subr.mxu0 0.0
    %732 = vmatpush1.msra.mxu0 0.0
    %733 = vmatprep.subr.mxu0 0.0
    %734 = vmatpush1.msra.mxu0 0.0
    %735 = vmatprep.subr.mxu0 0.0
    %736 = vmatpush1.msra.mxu0 0.0
    %737 = vmatprep.subr.mxu0 0.0
    %738 = vmatpush1.msra.mxu0 0.0
    %739 = vmatprep.subr.mxu0 0.0
    %740 = vmatpush1.msra.mxu0 0.0
    %741 = vmatprep.subr.mxu0 0.0
    %742 = vmatpush1.msra.mxu0 0.0
    %743 = vmatprep.subr.mxu0 0.0
    %744 = vmatpush1.msra.mxu0 0.0
    %745 = vmatprep.subr.mxu0 0.0
    %746 = vmatpush1.msra.mxu0 0.0
    %747 = vmatprep.subr.mxu0 0.0
    %748 = vmatpush1.msra.mxu0 0.0
    %749 = vmatprep.subr.mxu0 0.0
    %750 = vmatpush1.msra.mxu0 0.0
    %751 = vmatprep.subr.mxu0 0.0
    %752 = vmatpush1.msra.mxu0 0.0
    %753 = vmatprep.subr.mxu0 0.0
    %754 = vmatpush1.msra.mxu0 0.0
    %755 = vmatprep.subr.mxu0 0.0
    %756 = vmatpush1.msra.mxu0 0.0
    %757 = vmatprep.mubr.f32.mxu0 0.0
    %758 = vmatmul.mubr.f32.gmra.mrb[0].mxu0 %v691
    %v759 = vpop.f32.mrb[0].mxu0
    %v760 = vadd.f32 %v137, %v759
    %v761 = vpop.f32.mrb[0].mxu0
    %762 = vdwg.mxu0
    %v763 = vxor.u32 %v760, 2147483648
    %v764 = vmul.f32 %v763, 1.442695
    %v765 = vpow.pop %v764
    %v766 = vadd.f32 %v765, 1.0
    %v767 = vrcp.pop %v766
    %v768 = vmul.f32 1.0, %v767
    %v769 = vmul.f32 %v675, %v648
    %v770 = vsub.f32 1.0, %v675
    %772 = vrot.lane.b32.xlu0 %v666, 64
    %v773 = vpop.permute.xlu0 %772
    %v775 = vmul.f32 %v770, %v773
    %v776 = vadd.f32 %v769, %v775
    %v777 = vmul.f32 %v768, %v662
    %v778 = vadd.f32 %v776, %v777
    %v779 = vtanh.pop %v778
    %v780 = vmul.f32 %v688, %v659
    %v781 = vsub.f32 1.0, %v688
    %v782 = vmul.f32 %v781, %v773
    %v783 = vadd.f32 %v780, %v782
    %v784 = vmul.f32 %v768, %v648
    %786 = vrot.lane.b32.xlu0 %v784, 32
    %v787 = vpop.permute.xlu0 %786
    %v789 = vadd.f32 %v783, %v787
    %v790 = vtanh.pop %v789
    %792 = vrot.lane.b32.xlu0 %v790, 96
    %v793 = vpop.permute.xlu0 %792
    %s795 = scalar_lea.vmem [#allocation3], 8
    %796 = vst.msk [vmem:[%s795] sm:$0x3] %vm270, %v793
    %v797 = vld [vmem:[#allocation2 + $0xa] sm:$0x3]
    %v798 = vmul.f32 %v125, %v779
    %v799 = vadd.f32 %v797, %v798
    %v800 = vadd.f32 %v799, %v121
    %v801 = vxor.u32 %v800, 2147483648
    %v802 = vmul.f32 %v801, 1.442695
    %v803 = vpow.pop %v802
    %v804 = vadd.f32 %v803, 1.0
    %v805 = vrcp.pop %v804
    %v806 = vmul.f32 1.0, %v805
    %v807 = vmul.f32 %v133, %v779
    %809 = vrot.lane.b32.xlu0 %v807, 32
    %v810 = vpop.permute.xlu0 %809
    %v812 = vadd.f32 %v797, %v810
    %v813 = vadd.f32 %v812, %v156
    %v814 = vxor.u32 %v813, 2147483648
    %v815 = vmul.f32 %v814, 1.442695
    %v816 = vpow.pop %v815
    %v817 = vadd.f32 %v816, 1.0
    %v818 = vrcp.pop %v817
    %v819 = vmul.f32 1.0, %v818
    %v820 = vsel %vm295, %v779, %v790
    %v822 = vsel %vm165, %v820, 0
    %824 = vmatprep.subr.mxu0 0.0
    %825 = vmatpush1.msra.mxu0 %v109
    %826 = vmatprep.subr.mxu0 0.0
    %827 = vmatpush1.msra.mxu0 %v110
    %828 = vmatprep.subr.mxu0 0.0
    %829 = vmatpush1.msra.mxu0 %v111
    %830 = vmatprep.subr.mxu0 0.0
    %831 = vmatpush1.msra.mxu0 %v112
    %832 = vmatprep.subr.mxu0 0.0
    %833 = vmatpush1.msra.mxu0 %v113
    %834 = vmatprep.subr.mxu0 0.0
    %835 = vmatpush1.msra.mxu0 %v114
    %836 = vmatprep.subr.mxu0 0.0
    %837 = vmatpush1.msra.mxu0 %v115
    %838 = vmatprep.subr.mxu0 0.0
    %839 = vmatpush1.msra.mxu0 %v116
    %840 = vmatprep.subr.mxu0 0.0
    %841 = vmatpush1.msra.mxu0 0.0
    %842 = vmatprep.subr.mxu0 0.0
    %843 = vmatpush1.msra.mxu0 0.0
    %844 = vmatprep.subr.mxu0 0.0
    %845 = vmatpush1.msra.mxu0 0.0
    %846 = vmatprep.subr.mxu0 0.0
    %847 = vmatpush1.msra.mxu0 0.0
    %848 = vmatprep.subr.mxu0 0.0
    %849 = vmatpush1.msra.mxu0 0.0
    %850 = vmatprep.subr.mxu0 0.0
    %851 = vmatpush1.msra.mxu0 0.0
    %852 = vmatprep.subr.mxu0 0.0
    %853 = vmatpush1.msra.mxu0 0.0
    %854 = vmatprep.subr.mxu0 0.0
    %855 = vmatpush1.msra.mxu0 0.0
    %856 = vmatprep.subr.mxu0 0.0
    %857 = vmatpush1.msra.mxu0 0.0
    %858 = vmatprep.subr.mxu0 0.0
    %859 = vmatpush1.msra.mxu0 0.0
    %860 = vmatprep.subr.mxu0 0.0
    %861 = vmatpush1.msra.mxu0 0.0
    %862 = vmatprep.subr.mxu0 0.0
    %863 = vmatpush1.msra.mxu0 0.0
    %864 = vmatprep.subr.mxu0 0.0
    %865 = vmatpush1.msra.mxu0 0.0
    %866 = vmatprep.subr.mxu0 0.0
    %867 = vmatpush1.msra.mxu0 0.0
    %868 = vmatprep.subr.mxu0 0.0
    %869 = vmatpush1.msra.mxu0 0.0
    %870 = vmatprep.subr.mxu0 0.0
    %871 = vmatpush1.msra.mxu0 0.0
    %872 = vmatprep.subr.mxu0 0.0
    %873 = vmatpush1.msra.mxu0 0.0
    %874 = vmatprep.subr.mxu0 0.0
    %875 = vmatpush1.msra.mxu0 0.0
    %876 = vmatprep.subr.mxu0 0.0
    %877 = vmatpush1.msra.mxu0 0.0
    %878 = vmatprep.subr.mxu0 0.0
    %879 = vmatpush1.msra.mxu0 0.0
    %880 = vmatprep.subr.mxu0 0.0
    %881 = vmatpush1.msra.mxu0 0.0
    %882 = vmatprep.subr.mxu0 0.0
    %883 = vmatpush1.msra.mxu0 0.0
    %884 = vmatprep.subr.mxu0 0.0
    %885 = vmatpush1.msra.mxu0 0.0
    %886 = vmatprep.subr.mxu0 0.0
    %887 = vmatpush1.msra.mxu0 0.0
    %888 = vmatprep.mubr.f32.mxu0 0.0
    %889 = vmatmul.mubr.f32.gmra.mrb[0].mxu0 %v822
    %v890 = vpop.f32.mrb[0].mxu0
    %v891 = vadd.f32 %v137, %v890
    %v892 = vpop.f32.mrb[0].mxu0
    %893 = vdwg.mxu0
    %v894 = vxor.u32 %v891, 2147483648
    %v895 = vmul.f32 %v894, 1.442695
    %v896 = vpow.pop %v895
    %v897 = vadd.f32 %v896, 1.0
    %v898 = vrcp.pop %v897
    %v899 = vmul.f32 1.0, %v898
    %v900 = vmul.f32 %v806, %v779
    %v901 = vsub.f32 1.0, %v806
    %903 = vrot.lane.b32.xlu0 %v797, 64
    %v904 = vpop.permute.xlu0 %903
    %v906 = vmul.f32 %v901, %v904
    %v907 = vadd.f32 %v900, %v906
    %v908 = vmul.f32 %v899, %v793
    %v909 = vadd.f32 %v907, %v908
    %v910 = vtanh.pop %v909
    %v911 = vmul.f32 %v819, %v790
    %v912 = vsub.f32 1.0, %v819
    %v913 = vmul.f32 %v912, %v904
    %v914 = vadd.f32 %v911, %v913
    %v915 = vmul.f32 %v899, %v779
    %917 = vrot.lane.b32.xlu0 %v915, 32
    %v918 = vpop.permute.xlu0 %917
    %v920 = vadd.f32 %v914, %v918
    %v921 = vtanh.pop %v920
    %923 = vrot.lane.b32.xlu0 %v921, 96
    %v924 = vpop.permute.xlu0 %923
    %s926 = scalar_lea.vmem [#allocation3], 10
    %927 = vst.msk [vmem:[%s926] sm:$0x3] %vm270, %v924
    %v928 = vld [vmem:[#allocation2 + $0xc] sm:$0x3]
    %v929 = vmul.f32 %v125, %v910
    %v930 = vadd.f32 %v928, %v929
    %v931 = vadd.f32 %v930, %v121
    %v932 = vxor.u32 %v931, 2147483648
    %v933 = vmul.f32 %v932, 1.442695
    %v934 = vpow.pop %v933
    %v935 = vadd.f32 %v934, 1.0
    %v936 = vrcp.pop %v935
    %v937 = vmul.f32 1.0, %v936
    %v938 = vmul.f32 %v133, %v910
    %940 = vrot.lane.b32.xlu0 %v938, 32
    %v941 = vpop.permute.xlu0 %940
    %v943 = vadd.f32 %v928, %v941
    %v944 = vadd.f32 %v943, %v156
    %v945 = vxor.u32 %v944, 2147483648
    %v946 = vmul.f32 %v945, 1.442695
    %v947 = vpow.pop %v946
    %v948 = vadd.f32 %v947, 1.0
    %v949 = vrcp.pop %v948
    %v950 = vmul.f32 1.0, %v949
    %v951 = vsel %vm295, %v910, %v921
    %v953 = vsel %vm165, %v951, 0
    %955 = vmatprep.subr.mxu0 0.0
    %956 = vmatpush1.msra.mxu0 %v109
    %957 = vmatprep.subr.mxu0 0.0
    %958 = vmatpush1.msra.mxu0 %v110
    %959 = vmatprep.subr.mxu0 0.0
    %960 = vmatpush1.msra.mxu0 %v111
    %961 = vmatprep.subr.mxu0 0.0
    %962 = vmatpush1.msra.mxu0 %v112
    %963 = vmatprep.subr.mxu0 0.0
    %964 = vmatpush1.msra.mxu0 %v113
    %965 = vmatprep.subr.mxu0 0.0
    %966 = vmatpush1.msra.mxu0 %v114
    %967 = vmatprep.subr.mxu0 0.0
    %968 = vmatpush1.msra.mxu0 %v115
    %969 = vmatprep.subr.mxu0 0.0
    %970 = vmatpush1.msra.mxu0 %v116
    %971 = vmatprep.subr.mxu0 0.0
    %972 = vmatpush1.msra.mxu0 0.0
    %973 = vmatprep.subr.mxu0 0.0
    %974 = vmatpush1.msra.mxu0 0.0
    %975 = vmatprep.subr.mxu0 0.0
    %976 = vmatpush1.msra.mxu0 0.0
    %977 = vmatprep.subr.mxu0 0.0
    %978 = vmatpush1.msra.mxu0 0.0
    %979 = vmatprep.subr.mxu0 0.0
    %980 = vmatpush1.msra.mxu0 0.0
    %981 = vmatprep.subr.mxu0 0.0
    %982 = vmatpush1.msra.mxu0 0.0
    %983 = vmatprep.subr.mxu0 0.0
    %984 = vmatpush1.msra.mxu0 0.0
    %985 = vmatprep.subr.mxu0 0.0
    %986 = vmatpush1.msra.mxu0 0.0
    %987 = vmatprep.subr.mxu0 0.0
    %988 = vmatpush1.msra.mxu0 0.0
    %989 = vmatprep.subr.mxu0 0.0
    %990 = vmatpush1.msra.mxu0 0.0
    %991 = vmatprep.subr.mxu0 0.0
    %992 = vmatpush1.msra.mxu0 0.0
    %993 = vmatprep.subr.mxu0 0.0
    %994 = vmatpush1.msra.mxu0 0.0
    %995 = vmatprep.subr.mxu0 0.0
    %996 = vmatpush1.msra.mxu0 0.0
    %997 = vmatprep.subr.mxu0 0.0
    %998 = vmatpush1.msra.mxu0 0.0
    %999 = vmatprep.subr.mxu0 0.0
    %1000 = vmatpush1.msra.mxu0 0.0
    %1001 = vmatprep.subr.mxu0 0.0
    %1002 = vmatpush1.msra.mxu0 0.0
    %1003 = vmatprep.subr.mxu0 0.0
    %1004 = vmatpush1.msra.mxu0 0.0
    %1005 = vmatprep.subr.mxu0 0.0
    %1006 = vmatpush1.msra.mxu0 0.0
    %1007 = vmatprep.subr.mxu0 0.0
    %1008 = vmatpush1.msra.mxu0 0.0
    %1009 = vmatprep.subr.mxu0 0.0
    %1010 = vmatpush1.msra.mxu0 0.0
    %1011 = vmatprep.subr.mxu0 0.0
    %1012 = vmatpush1.msra.mxu0 0.0
    %1013 = vmatprep.subr.mxu0 0.0
    %1014 = vmatpush1.msra.mxu0 0.0
    %1015 = vmatprep.subr.mxu0 0.0
    %1016 = vmatpush1.msra.mxu0 0.0
    %1017 = vmatprep.subr.mxu0 0.0
    %1018 = vmatpush1.msra.mxu0 0.0
    %1019 = vmatprep.mubr.f32.mxu0 0.0
    %1020 = vmatmul.mubr.f32.gmra.mrb[0].mxu0 %v953
    %v1021 = vpop.f32.mrb[0].mxu0
    %v1022 = vadd.f32 %v137, %v1021
    %v1023 = vpop.f32.mrb[0].mxu0
    %1024 = vdwg.mxu0
    %v1025 = vxor.u32 %v1022, 2147483648
    %v1026 = vmul.f32 %v1025, 1.442695
    %v1027 = vpow.pop %v1026
    %v1028 = vadd.f32 %v1027, 1.0
    %v1029 = vrcp.pop %v1028
    %v1030 = vmul.f32 1.0, %v1029
    %v1031 = vmul.f32 %v937, %v910
    %v1032 = vsub.f32 1.0, %v937
    %1034 = vrot.lane.b32.xlu0 %v928, 64
    %v1035 = vpop.permute.xlu0 %1034
    %v1037 = vmul.f32 %v1032, %v1035
    %v1038 = vadd.f32 %v1031, %v1037
    %v1039 = vmul.f32 %v1030, %v924
    %v1040 = vadd.f32 %v1038, %v1039
    %v1041 = vtanh.pop %v1040
    %v1042 = vmul.f32 %v950, %v921
    %v1043 = vsub.f32 1.0, %v950
    %v1044 = vmul.f32 %v1043, %v1035
    %v1045 = vadd.f32 %v1042, %v1044
    %v1046 = vmul.f32 %v1030, %v910
    %1048 = vrot.lane.b32.xlu0 %v1046, 32
    %v1049 = vpop.permute.xlu0 %1048
    %v1051 = vadd.f32 %v1045, %v1049
    %v1052 = vtanh.pop %v1051
    %1054 = vrot.lane.b32.xlu0 %v1052, 96
    %v1055 = vpop.permute.xlu0 %1054
    %s1057 = scalar_lea.vmem [#allocation3], 12
    %1058 = vst.msk [vmem:[%s1057] sm:$0x3] %vm270, %v1055
    %v1059 = vld [vmem:[#allocation2 + $0xe] sm:$0x3]
    %v1060 = vmul.f32 %v125, %v1041
    %v1061 = vadd.f32 %v1059, %v1060
    %v1062 = vadd.f32 %v1061, %v121
    %v1063 = vxor.u32 %v1062, 2147483648
    %v1064 = vmul.f32 %v1063, 1.442695
    %v1065 = vpow.pop %v1064
    %v1066 = vadd.f32 %v1065, 1.0
    %v1067 = vrcp.pop %v1066
    %v1068 = vmul.f32 1.0, %v1067
    %v1069 = vmul.f32 %v133, %v1041
    %1071 = vrot.lane.b32.xlu0 %v1069, 32
    %v1072 = vpop.permute.xlu0 %1071
    %v1074 = vadd.f32 %v1059, %v1072
    %v1075 = vadd.f32 %v1074, %v156
    %v1076 = vxor.u32 %v1075, 2147483648
    %v1077 = vmul.f32 %v1076, 1.442695
    %v1078 = vpow.pop %v1077
    %v1079 = vadd.f32 %v1078, 1.0
    %v1080 = vrcp.pop %v1079
    %v1081 = vmul.f32 1.0, %v1080
    %v1082 = vsel %vm295, %v1041, %v1052
    %v1084 = vsel %vm165, %v1082, 0
    %1086 = vmatprep.subr.mxu0 0.0
    %1087 = vmatpush1.msra.mxu0 %v109
    %1088 = vmatprep.subr.mxu0 0.0
    %1089 = vmatpush1.msra.mxu0 %v110
    %1090 = vmatprep.subr.mxu0 0.0
    %1091 = vmatpush1.msra.mxu0 %v111
    %1092 = vmatprep.subr.mxu0 0.0
    %1093 = vmatpush1.msra.mxu0 %v112
    %1094 = vmatprep.subr.mxu0 0.0
    %1095 = vmatpush1.msra.mxu0 %v113
    %1096 = vmatprep.subr.mxu0 0.0
    %1097 = vmatpush1.msra.mxu0 %v114
    %1098 = vmatprep.subr.mxu0 0.0
    %1099 = vmatpush1.msra.mxu0 %v115
    %1100 = vmatprep.subr.mxu0 0.0
    %1101 = vmatpush1.msra.mxu0 %v116
    %1102 = vmatprep.subr.mxu0 0.0
    %1103 = vmatpush1.msra.mxu0 0.0
    %1104 = vmatprep.subr.mxu0 0.0
    %1105 = vmatpush1.msra.mxu0 0.0
    %1106 = vmatprep.subr.mxu0 0.0
    %1107 = vmatpush1.msra.mxu0 0.0
    %1108 = vmatprep.subr.mxu0 0.0
    %1109 = vmatpush1.msra.mxu0 0.0
    %1110 = vmatprep.subr.mxu0 0.0
    %1111 = vmatpush1.msra.mxu0 0.0
    %1112 = vmatprep.subr.mxu0 0.0
    %1113 = vmatpush1.msra.mxu0 0.0
    %1114 = vmatprep.subr.mxu0 0.0
    %1115 = vmatpush1.msra.mxu0 0.0
    %1116 = vmatprep.subr.mxu0 0.0
    %1117 = vmatpush1.msra.mxu0 0.0
    %1118 = vmatprep.subr.mxu0 0.0
    %1119 = vmatpush1.msra.mxu0 0.0
    %1120 = vmatprep.subr.mxu0 0.0
    %1121 = vmatpush1.msra.mxu0 0.0
    %1122 = vmatprep.subr.mxu0 0.0
    %1123 = vmatpush1.msra.mxu0 0.0
    %1124 = vmatprep.subr.mxu0 0.0
    %1125 = vmatpush1.msra.mxu0 0.0
    %1126 = vmatprep.subr.mxu0 0.0
    %1127 = vmatpush1.msra.mxu0 0.0
    %1128 = vmatprep.subr.mxu0 0.0
    %1129 = vmatpush1.msra.mxu0 0.0
    %1130 = vmatprep.subr.mxu0 0.0
    %1131 = vmatpush1.msra.mxu0 0.0
    %1132 = vmatprep.subr.mxu0 0.0
    %1133 = vmatpush1.msra.mxu0 0.0
    %1134 = vmatprep.subr.mxu0 0.0
    %1135 = vmatpush1.msra.mxu0 0.0
    %1136 = vmatprep.subr.mxu0 0.0
    %1137 = vmatpush1.msra.mxu0 0.0
    %1138 = vmatprep.subr.mxu0 0.0
    %1139 = vmatpush1.msra.mxu0 0.0
    %1140 = vmatprep.subr.mxu0 0.0
    %1141 = vmatpush1.msra.mxu0 0.0
    %1142 = vmatprep.subr.mxu0 0.0
    %1143 = vmatpush1.msra.mxu0 0.0
    %1144 = vmatprep.subr.mxu0 0.0
    %1145 = vmatpush1.msra.mxu0 0.0
    %1146 = vmatprep.subr.mxu0 0.0
    %1147 = vmatpush1.msra.mxu0 0.0
    %1148 = vmatprep.subr.mxu0 0.0
    %1149 = vmatpush1.msra.mxu0 0.0
    %1150 = vmatprep.mubr.f32.mxu0 0.0
    %1151 = vmatmul.mubr.f32.gmra.mrb[0].mxu0 %v1084
    %v1152 = vpop.f32.mrb[0].mxu0
    %v1153 = vadd.f32 %v137, %v1152
    %v1154 = vpop.f32.mrb[0].mxu0
    %1155 = vdwg.mxu0
    %v1156 = vxor.u32 %v1153, 2147483648
    %v1157 = vmul.f32 %v1156, 1.442695
    %v1158 = vpow.pop %v1157
    %v1159 = vadd.f32 %v1158, 1.0
    %v1160 = vrcp.pop %v1159
    %v1161 = vmul.f32 1.0, %v1160
    %v1162 = vmul.f32 %v1068, %v1041
    %v1163 = vsub.f32 1.0, %v1068
    %1165 = vrot.lane.b32.xlu0 %v1059, 64
    %v1166 = vpop.permute.xlu0 %1165
    %v1168 = vmul.f32 %v1163, %v1166
    %v1169 = vadd.f32 %v1162, %v1168
    %v1170 = vmul.f32 %v1161, %v1055
    %v1171 = vadd.f32 %v1169, %v1170
    %v1172 = vtanh.pop %v1171
    %v1173 = vmul.f32 %v1081, %v1052
    %v1174 = vsub.f32 1.0, %v1081
    %v1175 = vmul.f32 %v1174, %v1166
    %v1176 = vadd.f32 %v1173, %v1175
    %v1177 = vmul.f32 %v1161, %v1041
    %1179 = vrot.lane.b32.xlu0 %v1177, 32
    %v1180 = vpop.permute.xlu0 %1179
    %v1182 = vadd.f32 %v1176, %v1180
    %v1183 = vtanh.pop %v1182
    %1185 = vrot.lane.b32.xlu0 %v1183, 96
    %v1186 = vpop.permute.xlu0 %1185
    %s1188 = scalar_lea.vmem [#allocation3], 14
    %1189 = vst.msk [vmem:[%s1188] sm:$0x3] %vm270, %v1186
    %1190 = vst.msk [vmem:[#allocation5] sm:$0x3] %vm270, %v1186
    %1191 = vst.msk [vmem:[#allocation7] sm:$0x3] %vm270, %v1172
    // Predicated region
    $region18: #{tpu_custom_call.1} parent=1 // pred_check
      _
    $region19: #{tpu_custom_call.1} parent=1 // pred_check_branch
      %1193 = sbr.rel (0) target = $region21
    $region20: #{tpu_custom_call.1} parent=1 // pred_region
      %s1195 = ssub.s32 256, 256
      %1196 = vsyncadd [#allocation4], %s1195
      %s1197 = sshll.u32 [#allocation3], 4
      %s1198 = int_to_ptr.vmem [resolvable:$true] %s1197
      %1203 = dma.vmem_to_hbm [thread:$0]  %s1198, 256, %s4, [#allocation4], 32, 32, 2
    $region21: #{tpu_custom_call.1} parent=1 // pred_fallthru
      _
    // Predicated region
    $region22: #{tpu_custom_call.1} parent=1 // pred_check
      _
    $region23: #{tpu_custom_call.1} parent=1 // pred_check_branch
      %1205 = sbr.rel (0) target = $region25
    $region24: #{tpu_custom_call.1} parent=1 // pred_region
      %s1207 = ssub.s32 32, 32
      %1208 = vsyncadd [#allocation6], %s1207
      %s1210 = sshll.u32 [#allocation5], 4
      %s1211 = int_to_ptr.vmem [resolvable:$true] %s1210
      %1213 = dma.vmem_to_hbm [thread:$0]  %s1211, 32, %s5, [#allocation6]
    $region25: #{tpu_custom_call.1} parent=1 // pred_fallthru
      _
    // Predicated region
    $region26: #{tpu_custom_call.1} parent=1 // pred_check
      _
    $region27: #{tpu_custom_call.1} parent=1 // pred_check_branch
      %1215 = sbr.rel (0) target = $region29
    $region28: #{tpu_custom_call.1} parent=1 // pred_region
      %s1217 = ssub.s32 32, 32
      %1218 = vsyncadd [#allocation6], %s1217
      %s1220 = sshll.u32 [#allocation7], 4
      %s1221 = int_to_ptr.vmem [resolvable:$true] %s1220
      %1223 = dma.vmem_to_hbm [thread:$0]  %s1221, 32, %s6, [#allocation6]
    $region29: #{tpu_custom_call.1} parent=1 // pred_fallthru
      _
    // Predicated region
    $region30: #{tpu_custom_call.1} parent=1 // pred_check
      _
    $region31: #{tpu_custom_call.1} parent=1 // pred_check_branch
      %1225 = sbr.rel (0) target = $region33
    $region32: #{tpu_custom_call.1} parent=1 // pred_region
      %1226 = dma.done [#allocation4], 256
    $region33: #{tpu_custom_call.1} parent=1 // pred_fallthru
      _
    // Predicated region
    $region34: #{tpu_custom_call.1} parent=1 // pred_check
      _
    $region35: #{tpu_custom_call.1} parent=1 // pred_check_branch
      %1228 = sbr.rel (0) target = $region37
    $region36: #{tpu_custom_call.1} parent=1 // pred_region
      %1229 = dma.done [#allocation6], 32
    $region37: #{tpu_custom_call.1} parent=1 // pred_fallthru
      _
    // Predicated region
    $region38: #{tpu_custom_call.1} parent=1 // pred_check
      _
    $region39: #{tpu_custom_call.1} parent=1 // pred_check_branch
      %1231 = sbr.rel (0) target = $region41
    $region40: #{tpu_custom_call.1} parent=1 // pred_region
      %1232 = dma.done [#allocation6], 32
    $region41: #{tpu_custom_call.1} parent=1 // pred_fallthru
      _
    %1233 = vsyncpa [#allocation4], 1
    %1234 = vsyncpa [#allocation6], 1

</llo_original>
